<compile_context>
chip_gen: v6e
topology: v6e:2x2x1
jax: 0.10.0
libtpu: 0.0.40
codegen_flags: <defaults>
</compile_context>

<pallas_src>
import functools

import jax
import jax.numpy as jnp
from jax.experimental import pallas as pl
from jax.experimental.pallas import tpu as pltpu


LANE = 128
_RESIDENT_BUDGET_BYTES = 12 * 1024 * 1024  # v7x-safe (64 MiB VMEM), incl. double-buffering


def _round_up(v, m):
    return -(-v // m) * m


def _pad2d(a, row_mult, col_mult):
    r, c = a.shape
    rp, cp = _round_up(r, row_mult), _round_up(c, col_mult)
    if (rp, cp) == (r, c):
        return a
    return jnp.pad(a, ((0, rp - r), (0, cp - c)))


def _vmem_limit_bytes():
    """Per-generation VMEM budget: ~48 MiB on 64 MiB parts (v7x), ~96 MiB on 128 MiB parts."""
    try:
        cap = int(pltpu.get_tpu_info().vmem_capacity_bytes)
    except Exception:
        cap = 64 * 1024 * 1024  # conservative fallback
    return max(48 * 1024 * 1024, min(int(cap * 0.75), 112 * 1024 * 1024))


# ---------------------------------------------------------------------------
# Kernels.
# ---------------------------------------------------------------------------
def _gcn_fused_kernel(adj_ref, x_ref, w_ref, b_ref, o_ref, acc_ref, *, x_resident, tk):
    """out_tile = (sum_k adj_tile(i,k) @ x(k)) @ W + bias      grid = (row_tiles, k)."""
    k = pl.program_id(1)

    @pl.when(k == 0)
    def _():
        acc_ref[...] = jnp.zeros_like(acc_ref)

    if x_resident:
        row = pl.multiple_of(k * tk, tk)
        x_blk = x_ref[pl.ds(row, tk), :]
    else:
        x_blk = x_ref[...]
    acc_ref[...] += jnp.dot(adj_ref[...], x_blk, preferred_element_type=jnp.float32)

    @pl.when(k == pl.num_programs(1) - 1)
    def _():
        # Feature transform + bias fused into the finalize step (intermediate stays f32).
        y = jnp.dot(acc_ref[...], w_ref[...], preferred_element_type=jnp.float32)
        o_ref[...] = (y + b_ref[...]).astype(o_ref.dtype)


def _gcn_agg_kernel(adj_ref, s_ref, b_ref, o_ref, acc_ref, *, s_resident, tk):
    """out_tile = sum_k adj_tile(i,k) @ support(k) + bias      grid = (row_tiles, k)."""
    k = pl.program_id(1)

    @pl.when(k == 0)
    def _():
        acc_ref[...] = jnp.zeros_like(acc_ref)

    if s_resident:
        row = pl.multiple_of(k * tk, tk)
        s_blk = s_ref[pl.ds(row, tk), :]
    else:
        s_blk = s_ref[...]
    acc_ref[...] += jnp.dot(adj_ref[...], s_blk, preferred_element_type=jnp.float32)

    @pl.when(k == pl.num_programs(1) - 1)
    def _():
        o_ref[...] = (acc_ref[...] + b_ref[...]).astype(o_ref.dtype)


def _xw_kernel(x_ref, w_ref, o_ref):
    """support_tile = x_tile @ W, single K block: no accumulator / init / finalize."""
    o_ref[...] = jnp.dot(
        x_ref[...], w_ref[...], preferred_element_type=jnp.float32
    ).astype(o_ref.dtype)


# ---------------------------------------------------------------------------
# pallas_call wrappers.
# ---------------------------------------------------------------------------
def _fused_gcn_call(adj_p, x_p, w_p, bias_p, *, tm, tk, vmem_limit):
    mp, kp = adj_p.shape
    finp = x_p.shape[1]
    foutp = w_p.shape[1]
    grid = (mp // tm, kp // tk)

    x_resident = 2 * kp * finp * x_p.dtype.itemsize <= _RESIDENT_BUDGET_BYTES
    if x_resident:
        x_spec = pl.BlockSpec((kp, finp), lambda i, k: (0, 0))   # DMA'd once, stays in VMEM
    else:
        x_spec = pl.BlockSpec((tk, finp), lambda i, k: (k, 0))

    flops = 2 * mp * kp * finp + 2 * mp * finp * foutp
    bytes_accessed = (
        adj_p.size * adj_p.dtype.itemsize
        + x_p.size * x_p.dtype.itemsize
        + w_p.size * w_p.dtype.itemsize
        + mp * foutp * 4
    )

    return pl.pallas_call(
        functools.partial(_gcn_fused_kernel, x_resident=x_resident, tk=tk),
        out_shape=jax.ShapeDtypeStruct((mp, foutp), jnp.float32),
        grid_spec=pltpu.PrefetchScalarGridSpec(
            num_scalar_prefetch=0,
            grid=grid,
            in_specs=[
                pl.BlockSpec((tm, tk), lambda i, k: (i, k)),        # adjacency stream
                x_spec,                                             # node features
                pl.BlockSpec((finp, foutp), lambda i, k: (0, 0)),   # resident W (f32)
                pl.BlockSpec((1, foutp), lambda i, k: (0, 0)),      # resident bias
            ],
            out_specs=pl.BlockSpec((tm, foutp), lambda i, k: (i, 0)),
            scratch_shapes=[pltpu.VMEM((tm, finp), jnp.float32)],
        ),
        compiler_params=pltpu.CompilerParams(
            dimension_semantics=("parallel", "arbitrary"),
            vmem_limit_bytes=vmem_limit,
        ),
        cost_estimate=pl.CostEstimate(
            flops=flops, transcendentals=0, bytes_accessed=bytes_accessed
        ),
    )(adj_p, x_p, w_p, bias_p)


def _agg_bias_call(adj_p, s_p, bias_p, *, tm, tk, vmem_limit):
    mp, kp = adj_p.shape
    foutp = s_p.shape[1]
    grid = (mp // tm, kp // tk)

    s_resident = 2 * kp * foutp * s_p.dtype.itemsize <= _RESIDENT_BUDGET_BYTES
    if s_resident:
        s_spec = pl.BlockSpec((kp, foutp), lambda i, k: (0, 0))
    else:
        s_spec = pl.BlockSpec((tk, foutp), lambda i, k: (k, 0))

    flops = 2 * mp * kp * foutp
    bytes_accessed = (
        adj_p.size * adj_p.dtype.itemsize
        + s_p.size * s_p.dtype.itemsize
        + mp * foutp * 4
    )

    return pl.pallas_call(
        functools.partial(_gcn_agg_kernel, s_resident=s_resident, tk=tk),
        out_shape=jax.ShapeDtypeStruct((mp, foutp), jnp.float32),
        grid_spec=pltpu.PrefetchScalarGridSpec(
            num_scalar_prefetch=0,
            grid=grid,
            in_specs=[
                pl.BlockSpec((tm, tk), lambda i, k: (i, k)),
                s_spec,
                pl.BlockSpec((1, foutp), lambda i, k: (0, 0)),
            ],
            out_specs=pl.BlockSpec((tm, foutp), lambda i, k: (i, 0)),
            scratch_shapes=[pltpu.VMEM((tm, foutp), jnp.float32)],
        ),
        compiler_params=pltpu.CompilerParams(
            dimension_semantics=("parallel", "arbitrary"),
            vmem_limit_bytes=vmem_limit,
        ),
        cost_estimate=pl.CostEstimate(
            flops=flops, transcendentals=0, bytes_accessed=bytes_accessed
        ),
    )(adj_p, s_p, bias_p)


def _xw_call(x_p, w_p, *, tk, out_dtype, vmem_limit):
    kp, finp = x_p.shape
    foutp = w_p.shape[1]
    grid = (kp // tk,)
    # TODO(synk): no K-tiling of the Fin axis here; assumes round_up(Fin,128) fits one
    # VMEM block, which holds for typical GCN widths.

    flops = 2 * kp * finp * foutp
    bytes_accessed = (
        x_p.size * x_p.dtype.itemsize
        + w_p.size * w_p.dtype.itemsize
        + kp * foutp * jnp.dtype(out_dtype).itemsize
    )

    return pl.pallas_call(
        _xw_kernel,
        out_shape=jax.ShapeDtypeStruct((kp, foutp), out_dtype),
        grid_spec=pltpu.PrefetchScalarGridSpec(
            num_scalar_prefetch=0,
            grid=grid,
            in_specs=[
                pl.BlockSpec((tk, finp), lambda i: (i, 0)),
                pl.BlockSpec((finp, foutp), lambda i: (0, 0)),
            ],
            out_specs=pl.BlockSpec((tk, foutp), lambda i: (i, 0)),
        ),
        compiler_params=pltpu.CompilerParams(
            dimension_semantics=("parallel",),
            vmem_limit_bytes=vmem_limit,
        ),
        cost_estimate=pl.CostEstimate(
            flops=flops, transcendentals=0, bytes_accessed=bytes_accessed
        ),
    )(x_p, w_p)


# ---------------------------------------------------------------------------
# GCN layer forward.
# ---------------------------------------------------------------------------
def choose_tiles(n_nodes, *, tm=512, tk=512):
    """Large (512) tiles for the HBM-bound adjacency stream; keep >=2 row tiles when
    it costs no extra padding so v7x's two TensorCores both get work."""
    mp_min = _round_up(n_nodes, LANE)
    tm = min(tm, mp_min)
    if mp_min // tm < 2 and mp_min % 256 == 0:
        tm = mp_min // 2
    tk = min(tk, mp_min)
    return tm, tk


def prepare_adjacency(adj, *, tm, tk, compute_dtype=jnp.bfloat16):
    """Cast + pad the dense normalized adjacency ONCE; reuse across layers / steps."""
    return _pad2d(adj.astype(compute_dtype), tm, tk)


@functools.partial(jax.jit, static_argnames=("tm", "tk", "compute_dtype"))
def graph_convolution(x, adj_p, weight, bias=None, *, tm, tk,
                      compute_dtype=jnp.bfloat16):
    """GCN forward: adj @ (x @ weight) + bias.

    x:      (N, Fin)  node features (float32)
    adj_p:  prepare_adjacency(adj, tm=tm, tk=tk) -- padded bf16 (Mp, Kp)
    weight: (Fin, Fout)
    bias:   (Fout,) or None
    Returns (N, Fout) float32.
    """
    n, fin = x.shape
    fout = weight.shape[1]
    mp, kp = adj_p.shape
    assert mp == _round_up(n, tm) and kp == _round_up(n, tk), \
        "adjacency was prepared with different tiles / node count"
    finp = _round_up(fin, LANE)
    foutp = _round_up(fout, LANE)
    del finp, foutp  # (documented sizes; padding handled below)

    bias_arr = bias if bias is not None else jnp.zeros((fout,), jnp.float32)
    bias_p = _pad2d(bias_arr.astype(jnp.float32).reshape(1, fout), 1, LANE)

    # x rows are contracted against adj columns -> pad rows to Kp.
    x_p = _pad2d(x.astype(compute_dtype), tk, LANE)
    vmem_limit = _vmem_limit_bytes()

    if fin <= fout:
        # Single fused kernel: out = (adj @ x) @ W + bias.  The (N, Fin) intermediate
        # lives only in the f32 VMEM accumulator (no HBM round trip, no extra rounding).
        w_p = _pad2d(weight.astype(jnp.float32), LANE, LANE)
        out = _fused_gcn_call(adj_p, x_p, w_p, bias_p, tm=tm, tk=tk,
                              vmem_limit=vmem_limit)
    else:
        # support = x @ W (small, single-shot), then out = adj @ support + bias.
        # support stays padded (Kp, Foutp) bf16 and feeds the aggregation kernel
        # directly -- no slice / re-pad between the two pallas_calls.
        w_p = _pad2d(weight.astype(compute_dtype), LANE, LANE)
        support_p = _xw_call(x_p, w_p, tk=tk, out_dtype=compute_dtype,
                             vmem_limit=vmem_limit)
        out = _agg_bias_call(adj_p, support_p, bias_p, tm=tm, tk=tk,
                             vmem_limit=vmem_limit)

    return out[:n, :fout]


def init_parameters(key, input_dim, output_dim):
    """Match nn.init.kaiming_uniform_ (a=0, fan_in=output_dim) + zero bias."""
    bound = jnp.sqrt(6.0 / output_dim)
    weight = jax.random.uniform(
        key, (input_dim, output_dim), minval=-bound, maxval=bound, dtype=jnp.float32
    )
    bias = jnp.zeros((output_dim,), dtype=jnp.float32)
    return weight, bias


if __name__ == "__main__":
    # Layer 1: 64 -> 128 (Fin <= Fout, fused path); Layer 2: 128 -> 32 (two-stage path).
    N, F_IN, F_HID, F_OUT = 512, 64, 128, 32

    key = jax.random.PRNGKey(0)
    k_w1, k_w2, k_x, k_a = jax.random.split(key, 4)

    w1, b1 = init_parameters(k_w1, F_IN, F_HID)
    w2, b2 = init_parameters(k_w2, F_HID, F_OUT)

    x = jax.random.normal(k_x, (N, F_IN), dtype=jnp.float32)

    # Dense row-normalized adjacency D^-1 (A + I) (what spmm would consume, densified).
    a_raw = (jax.random.uniform(k_a, (N, N)) < 0.1).astype(jnp.float32)
    a_sym = jnp.maximum(a_raw, a_raw.T) + jnp.eye(N, dtype=jnp.float32)
    adj = a_sym / jnp.sum(a_sym, axis=1, keepdims=True)

    # Adjacency cast + pad hoisted out of the per-layer path: done once, reused twice.
    tm, tk = choose_tiles(N)
    adj_p = prepare_adjacency(adj, tm=tm, tk=tk)

    out1 = graph_convolution(x, adj_p, w1, b1, tm=tm, tk=tk)
    out2 = graph_convolution(out1, adj_p, w2, b2, tm=tm, tk=tk)
    out1, out2 = jax.block_until_ready((out1, out2))

    # References (full f32, torch semantics).  Loose tolerance accounts for bf16 MXU
    # inputs (accumulation stays f32 throughout).
    ref1 = adj @ (x @ w1) + b1
    ref2 = adj @ (out1 @ w2) + b2

    assert out1.shape == (N, F_HID) and out1.dtype == jnp.float32
    assert out2.shape == (N, F_OUT) and out2.dtype == jnp.float32
    assert jnp.allclose(out1, ref1, atol=5e-2, rtol=5e-2), "layer-1 mismatch vs reference"
    assert jnp.allclose(out2, ref2, atol=5e-2, rtol=5e-2), "layer-2 mismatch vs reference"

    print("KERNEL_OK")
</pallas_src>

<mosaic_0001>
module attributes {stable_mosaic.version = 11 : i64} {
  func.func @_gcn_fused_kernel(%arg0: i32, %arg1: i32, %arg2: memref<256x512xbf16, #tpu.memory_space<vmem>>, %arg3: memref<512x128xbf16, #tpu.memory_space<vmem>>, %arg4: memref<128x128xf32, #tpu.memory_space<vmem>>, %arg5: memref<1x128xf32, #tpu.memory_space<vmem>>, %arg6: memref<256x128xf32, #tpu.memory_space<vmem>>, %arg7: memref<256x128xf32, #tpu.memory_space<vmem>>) attributes {dimension_semantics = [#tpu.dimension_semantics<parallel>, #tpu.dimension_semantics<arbitrary>], iteration_bounds = array<i64: 2, 1>, scalar_prefetch = 0 : i64, scratch_operands = 1 : i64, tpu.core_type = #tpu.core_type<tc>, window_params = [{transform_indices = @transform_0, window_bounds = array<i64: 256, 512>}, {pipeline_mode = #tpu.pipeline_mode<synchronous>, transform_indices = @transform_1, window_bounds = array<i64: 512, 128>}, {pipeline_mode = #tpu.pipeline_mode<synchronous>, transform_indices = @transform_2, window_bounds = array<i64: 128, 128>}, {pipeline_mode = #tpu.pipeline_mode<synchronous>, transform_indices = @transform_3, window_bounds = array<i64: 1, 128>}, {transform_indices = @transform_4, window_bounds = array<i64: 256, 128>}]} {
    %c0_i32 = arith.constant 0 : i32
    %0 = arith.cmpi eq, %arg1, %c0_i32 : i32
    %1 = arith.extui %0 : i1 to i32
    %c0_i32_0 = arith.constant 0 : i32
    %2 = arith.cmpi ne, %1, %c0_i32_0 : i32
    scf.if %2 {
      %cst_9 = arith.constant 0.000000e+00 : f32
      %15 = vector.broadcast %cst_9 : f32 to vector<256x128xf32>
      %c0_10 = arith.constant 0 : index
      %c0_11 = arith.constant 0 : index
      %16 = vector.load %arg7[%c0_10, %c0_11] : memref<256x128xf32, #tpu.memory_space<vmem>>, vector<256x128xf32>
      tpu.vector_store %arg7[%c0_10, %c0_11], %15 {strides = array<i32>} : memref<256x128xf32, #tpu.memory_space<vmem>>, vector<256x128xf32>,
    } else {
    }
    %c512_i32 = arith.constant 512 : i32
    %3 = arith.muli %arg1, %c512_i32 : i32
    %4 = tpu.assume_multiple %3, 512 : i32
    %5 = arith.index_cast %4 : i32 to index
    %c0 = arith.constant 0 : index
    %6 = vector.load %arg3[%5, %c0] : memref<512x128xbf16, #tpu.memory_space<vmem>>, vector<512x128xbf16>
    %c0_1 = arith.constant 0 : index
    %c0_2 = arith.constant 0 : index
    %7 = vector.load %arg7[%c0_1, %c0_2] : memref<256x128xf32, #tpu.memory_space<vmem>>, vector<256x128xf32>
    %c0_3 = arith.constant 0 : index
    %c0_4 = arith.constant 0 : index
    %8 = vector.load %arg2[%c0_3, %c0_4] : memref<256x512xbf16, #tpu.memory_space<vmem>>, vector<256x512xbf16>
    %cst = arith.constant dense<0.000000e+00> : vector<256x128xf32>
    %9 = tpu.matmul %8, %6, %cst {dimension_numbers = #tpu.dot_dimension_numbers<[1], [0], [0], [1], [0, 0, 1, 1], [], []>} : vector<256x512xbf16>, vector<512x128xbf16>, vector<256x128xf32> -> vector<256x128xf32>
    %10 = arith.addf %7, %9 : vector<256x128xf32>
    %c0_5 = arith.constant 0 : index
    %c0_6 = arith.constant 0 : index
    %11 = vector.load %arg7[%c0_5, %c0_6] : memref<256x128xf32, #tpu.memory_space<vmem>>, vector<256x128xf32>
    tpu.vector_store %arg7[%c0_5, %c0_6], %10 {strides = array<i32>} : memref<256x128xf32, #tpu.memory_space<vmem>>, vector<256x128xf32>,
    %c0_i32_7 = arith.constant 0 : i32
    %12 = arith.cmpi eq, %arg1, %c0_i32_7 : i32
    %13 = arith.extui %12 : i1 to i32
    %c0_i32_8 = arith.constant 0 : i32
    %14 = arith.cmpi ne, %13, %c0_i32_8 : i32
    scf.if %14 {
      %c0_9 = arith.constant 0 : index
      %c0_10 = arith.constant 0 : index
      %15 = vector.load %arg7[%c0_9, %c0_10] : memref<256x128xf32, #tpu.memory_space<vmem>>, vector<256x128xf32>
      %c0_11 = arith.constant 0 : index
      %c0_12 = arith.constant 0 : index
      %16 = vector.load %arg4[%c0_11, %c0_12] : memref<128x128xf32, #tpu.memory_space<vmem>>, vector<128x128xf32>
      %cst_13 = arith.constant dense<0.000000e+00> : vector<256x128xf32>
      %17 = tpu.matmul %15, %16, %cst_13 {dimension_numbers = #tpu.dot_dimension_numbers<[1], [0], [0], [1], [0, 0, 1, 1], [], []>} : vector<256x128xf32>, vector<128x128xf32>, vector<256x128xf32> -> vector<256x128xf32>
      %c0_14 = arith.constant 0 : index
      %c0_15 = arith.constant 0 : index
      %18 = vector.load %arg5[%c0_14, %c0_15] : memref<1x128xf32, #tpu.memory_space<vmem>>, vector<1x128xf32>
      %19 = vector.broadcast %18 : vector<1x128xf32> to vector<256x128xf32>
      %20 = arith.addf %17, %19 : vector<256x128xf32>
      %c0_16 = arith.constant 0 : index
      %c0_17 = arith.constant 0 : index
      %21 = vector.load %arg6[%c0_16, %c0_17] : memref<256x128xf32, #tpu.memory_space<vmem>>, vector<256x128xf32>
      tpu.vector_store %arg6[%c0_16, %c0_17], %20 {strides = array<i32>} : memref<256x128xf32, #tpu.memory_space<vmem>>, vector<256x128xf32>,
    } else {
    }
    return
  }
  func.func @transform_0(%arg0: i32, %arg1: i32) -> (i32, i32) {
    %c0_i32 = arith.constant 0 : i32
    return %arg0, %arg1 : i32, i32
  }
  func.func @transform_1(%arg0: i32, %arg1: i32) -> (i32, i32) {
    %c0_i32 = arith.constant 0 : i32
    %c0_i32_0 = arith.constant 0 : i32
    %c0_i32_1 = arith.constant 0 : i32
    return %c0_i32, %c0_i32_0 : i32, i32
  }
  func.func @transform_2(%arg0: i32, %arg1: i32) -> (i32, i32) {
    %c0_i32 = arith.constant 0 : i32
    %c0_i32_0 = arith.constant 0 : i32
    %c0_i32_1 = arith.constant 0 : i32
    return %c0_i32, %c0_i32_0 : i32, i32
  }
  func.func @transform_3(%arg0: i32, %arg1: i32) -> (i32, i32) {
    %c0_i32 = arith.constant 0 : i32
    %c0_i32_0 = arith.constant 0 : i32
    %c0_i32_1 = arith.constant 0 : i32
    return %c0_i32, %c0_i32_0 : i32, i32
  }
  func.func @transform_4(%arg0: i32, %arg1: i32) -> (i32, i32) {
    %c0_i32 = arith.constant 0 : i32
    %c0_i32_0 = arith.constant 0 : i32
    return %arg0, %c0_i32 : i32, i32
  }
}

</mosaic_0001>

<llo_original>
// kernel: graph_convolution.1
$region0: #{graph_convolution.1}
  #allocation0 [shape = 'u32[]', space=smem, size = 0x4, offset = 0x4, fixed_abs, tag = 'smem constant byte address 0x4 - core index']
  #allocation1 [shape = 'u32[144,128]{1,0:T(1,128)}', space=vmem, size = 0x12000, scoped, tag = 'internal scratch']
  #allocation2 [shape = 'f32[256,128]{1,0:T(8,128)}', space=vmem, size = 0x20000, scoped, tag = 'scratch operand']
  %s0 = inlined_call_operand.vmem [shape: bf16[512,512], index: 0, kind: input, shape index: {}]
  %s1 = inlined_call_operand.vmem [shape: bf16[512,128], index: 1, kind: input, shape index: {}]
  %s2 = inlined_call_operand.vmem [shape: f32[128,128], index: 2, kind: input, shape index: {}]
  %s3 = inlined_call_operand.vmem [shape: f32[1,128], index: 3, kind: input, shape index: {}]
  %s4 = inlined_call_operand.hbm [shape: f32[512,128], index: 4, kind: output, shape index: {}]
  %s5 = sld [smem:[#allocation0]]
  $region57: #{graph_convolution.1} parent=0
    _
  %s7 = ssub.s32 1, %s5
  %s8 = scalar_select 0, %s7, %s5
  $region1: #{graph_convolution.1} parent=0
    #allocation3 [shape = 'u8[262144]{0}', space=vmem, size = 0x40000, scoped, tag = 'output window, operand 0']
    #allocation4 [shape = 's32[2]{0}', space=sflag, size = 0x8, scoped, tag = 'scoped memory for graph_convolution.1']
    %9 = vsyncpa [#allocation4], 0
    %s10 = scalar_lea.sflag [#allocation4], 1
    %11 = vsyncpa %s10, 0
    loop: start=0, step=1, limit=4
    $region2: #{graph_convolution.1} parent=1 // loop_pre_header
      _
    $region3: #{graph_convolution.1} parent=1 // loop_header
      %s13 = sphi 0, %s17
      %p14 = scmp.ge.s32.totalorder %s13, 4
      %s20 = sphi 0, %s32
      %s21 = sphi 0, %s28
      %s22 = sphi 0, %s20
      %s23 = sphi 0, %s21
      %s24 = sphi 0, %s22
      %s25 = sphi 0, %s23
      %s37 = sphi 0, %s39
      %s40 = sphi 0, %s37
      %s41 = sphi 0, %s40
      %s57 = sphi 0, %s41
      %s61 = sphi 0, %s61
      %s63 = sphi 0, %s61
      %s64 = sphi 0, %s63
      %s78 = sphi 0, %s64
      %s82 = sphi 0, %s82
      %s84 = sphi 0, %s82
      %s85 = sphi 0, %s84
      %s99 = sphi 0, %s85
      %s103 = sphi 0, %s103
      %s105 = sphi 0, %s103
      %s106 = sphi 0, %s105
      %s120 = sphi 0, %s106
      %s126 = sphi 0, %s128
      %s129 = sphi 0, %s126
      %s130 = sphi 0, %s129
      %s146 = sphi 0, %s130
    $region4: #{graph_convolution.1} parent=1 // loop_header_branch
      %16 = sbr.rel (%p14) target = $region8
    $region5: #{graph_convolution.1} parent=1 // loop_body
      %s18 = ssub.s32 %s13, 1
      %s19 = ssub.s32 %s13, 2
      %s26 = sadd.s32 1, %s21
      %p27 = scmp.ge.s32.totalorder %s26, 1
      %s28 = scalar_select %p27, 0, %s26
      %s29 = sadd.s32 1, %s20
      %s30 = scalar_select %p27, %s29, %s20
      %p31 = scmp.ge.s32.totalorder %s30, 2
      %s32 = scalar_select %p31, 0, %s30
      %s33 = ssub.s32 %s20, %s32
      %s34 = ssub.s32 %s21, %s28
      %s35 = sor.u32 %s33, %s34
      %p36 = scmp.eq.s32.totalorder %s35, 0
      %s38 = sadd.s32 %s37, 1
      %s39 = scalar_select %p36, %s37, %s38
      %p42 = pneg %p36
      %p43 = scmp.eq.s32.totalorder %s13, 1
      %p44 = por %p42, %p43
      %p45 = scmp.ne.s32.totalorder %s37, %s40
      %p46 = scmp.eq.s32.totalorder %s13, 0
      %p47 = por %p45, %p46
      %p48 = scmp.ne.s32.totalorder %s37, %s40
      %p49 = scmp.eq.s32.totalorder %s18, 1
      %p50 = por %p48, %p49
      %p51 = scmp.ne.s32.totalorder %s40, %s41
      %p52 = scmp.eq.s32.totalorder %s18, 0
      %p53 = por %p51, %p52
      %p54 = scmp.ne.s32.totalorder %s40, %s41
      %p55 = scmp.eq.s32.totalorder %s19, 1
      %p56 = por %p54, %p55
      %p58 = scmp.ne.s32.totalorder %s41, %s57
      %p59 = scmp.eq.s32.totalorder %s19, 0
      %p60 = por %p58, %p59
      %s62 = sadd.s32 %s61, 1
      %p65 = scmp.eq.s32.totalorder %s13, 1
      %p66 = scmp.ne.s32.totalorder %s61, %s63
      %p67 = scmp.eq.s32.totalorder %s13, 0
      %p68 = por %p66, %p67
      %p69 = scmp.ne.s32.totalorder %s61, %s63
      %p70 = scmp.eq.s32.totalorder %s18, 1
      %p71 = por %p69, %p70
      %p72 = scmp.ne.s32.totalorder %s63, %s64
      %p73 = scmp.eq.s32.totalorder %s18, 0
      %p74 = por %p72, %p73
      %p75 = scmp.ne.s32.totalorder %s63, %s64
      %p76 = scmp.eq.s32.totalorder %s19, 1
      %p77 = por %p75, %p76
      %p79 = scmp.ne.s32.totalorder %s64, %s78
      %p80 = scmp.eq.s32.totalorder %s19, 0
      %p81 = por %p79, %p80
      %s83 = sadd.s32 %s82, 1
      %p86 = scmp.eq.s32.totalorder %s13, 1
      %p87 = scmp.ne.s32.totalorder %s82, %s84
      %p88 = scmp.eq.s32.totalorder %s13, 0
      %p89 = por %p87, %p88
      %p90 = scmp.ne.s32.totalorder %s82, %s84
      %p91 = scmp.eq.s32.totalorder %s18, 1
      %p92 = por %p90, %p91
      %p93 = scmp.ne.s32.totalorder %s84, %s85
      %p94 = scmp.eq.s32.totalorder %s18, 0
      %p95 = por %p93, %p94
      %p96 = scmp.ne.s32.totalorder %s84, %s85
      %p97 = scmp.eq.s32.totalorder %s19, 1
      %p98 = por %p96, %p97
      %p100 = scmp.ne.s32.totalorder %s85, %s99
      %p101 = scmp.eq.s32.totalorder %s19, 0
      %p102 = por %p100, %p101
      %s104 = sadd.s32 %s103, 1
      %p107 = scmp.eq.s32.totalorder %s13, 1
      %p108 = scmp.ne.s32.totalorder %s103, %s105
      %p109 = scmp.eq.s32.totalorder %s13, 0
      %p110 = por %p108, %p109
      %p111 = scmp.ne.s32.totalorder %s103, %s105
      %p112 = scmp.eq.s32.totalorder %s18, 1
      %p113 = por %p111, %p112
      %p114 = scmp.ne.s32.totalorder %s105, %s106
      %p115 = scmp.eq.s32.totalorder %s18, 0
      %p116 = por %p114, %p115
      %p117 = scmp.ne.s32.totalorder %s105, %s106
      %p118 = scmp.eq.s32.totalorder %s19, 1
      %p119 = por %p117, %p118
      %p121 = scmp.ne.s32.totalorder %s106, %s120
      %p122 = scmp.eq.s32.totalorder %s19, 0
      %p123 = por %p121, %p122
      %s124 = ssub.s32 %s20, %s32
      %p125 = scmp.eq.s32.totalorder %s124, 0
      %s127 = sadd.s32 %s126, 1
      %s128 = scalar_select %p125, %s126, %s127
      %p131 = pneg %p125
      %p132 = scmp.eq.s32.totalorder %s13, 1
      %p133 = por %p131, %p132
      %p134 = scmp.ne.s32.totalorder %s126, %s129
      %p135 = scmp.eq.s32.totalorder %s13, 0
      %p136 = por %p134, %p135
      %p137 = scmp.ne.s32.totalorder %s126, %s129
      %p138 = scmp.eq.s32.totalorder %s18, 1
      %p139 = por %p137, %p138
      %p140 = scmp.ne.s32.totalorder %s129, %s130
      %p141 = scmp.eq.s32.totalorder %s18, 0
      %p142 = por %p140, %p141
      %p143 = scmp.ne.s32.totalorder %s129, %s130
      %p144 = scmp.eq.s32.totalorder %s19, 1
      %p145 = por %p143, %p144
      %p147 = scmp.ne.s32.totalorder %s130, %s146
      %p148 = scmp.eq.s32.totalorder %s19, 0
      %p149 = por %p147, %p148
      %p150 = scmp.le.s32.totalorder 1, %s13
      %p151 = scmp.lt.s32.totalorder %s13, 3
      %p152 = pnand %p150, %p151
      %p153 = pneg %p152
      // Predicated region
      $region9: #{graph_convolution.1} parent=5 // pred_check
        _
      $region10: #{graph_convolution.1} parent=5 // pred_check_branch
        %155 = sbr.rel (%p152) target = $region12
      $region11: #{graph_convolution.1} parent=5 // pred_region
        %s156 = ssub.s32 %s13, 1
        // Predicated region
        $region13: #{graph_convolution.1} parent=11 // pred_check
          %p157 = pneg %p74
        $region14: #{graph_convolution.1} parent=11 // pred_check_branch
          %159 = sbr.rel (%p157) target = $region16
        $region15: #{graph_convolution.1} parent=11 // pred_region
          _
        $region16: #{graph_convolution.1} parent=11 // pred_fallthru
          _
        // Predicated region
        $region17: #{graph_convolution.1} parent=11 // pred_check
          %p160 = pneg %p95
        $region18: #{graph_convolution.1} parent=11 // pred_check_branch
          %162 = sbr.rel (%p160) target = $region20
        $region19: #{graph_convolution.1} parent=11 // pred_region
          _
        $region20: #{graph_convolution.1} parent=11 // pred_fallthru
          _
        // Predicated region
        $region21: #{graph_convolution.1} parent=11 // pred_check
          %p163 = pneg %p116
        $region22: #{graph_convolution.1} parent=11 // pred_check_branch
          %165 = sbr.rel (%p163) target = $region24
        $region23: #{graph_convolution.1} parent=11 // pred_region
          _
        $region24: #{graph_convolution.1} parent=11 // pred_fallthru
          _
      $region12: #{graph_convolution.1} parent=5 // pred_fallthru
        _
      %p166 = scmp.lt.s32.totalorder %s13, 2
      // Predicated region
      $region25: #{graph_convolution.1} parent=5 // pred_check
        %p167 = pneg %p166
      $region26: #{graph_convolution.1} parent=5 // pred_check_branch
        %169 = sbr.rel (%p167) target = $region28
      $region27: #{graph_convolution.1} parent=5 // pred_region
        // Predicated region
        $region29: #{graph_convolution.1} parent=27 // pred_check
          %p170 = pneg %p47
        $region30: #{graph_convolution.1} parent=27 // pred_check_branch
          %172 = sbr.rel (%p170) target = $region32
        $region31: #{graph_convolution.1} parent=27 // pred_region
          %s173 = smul.u32 32, %s20
          %s174 = smul.u32 4, %s21
          %p175 = scmp.lt.s32.totalorder %s173, 63
          %s176 = scalar_select %p175, %s173, 63
          %p177 = scmp.lt.s32.totalorder %s174, 3
          %s178 = scalar_select %p177, %s174, 3
          %s179 = smul.addr %s176, 4
          %s180 = sadd.s32 %s178, %s179
          %s181 = smul.addr %s180, 4
          %s182 = scalar_lea.vmem %s0, %s181
          %s183 = smul.u32 32, %s20
          %s184 = smul.u32 4, %s21
        $region32: #{graph_convolution.1} parent=27 // pred_fallthru
          _
      $region28: #{graph_convolution.1} parent=5 // pred_fallthru
        _
      %p185 = scmp.le.s32.totalorder 1, %s13
      %p186 = scmp.lt.s32.totalorder %s13, 3
      %p187 = pnand %p185, %p186
      %p188 = pneg %p187
      // Predicated region
      $region33: #{graph_convolution.1} parent=5 // pred_check
        _
      $region34: #{graph_convolution.1} parent=5 // pred_check_branch
        %190 = sbr.rel (%p187) target = $region36
      $region35: #{graph_convolution.1} parent=5 // pred_region
        %s191 = ssub.s32 %s13, 1
        %s192 = smul.u32 32, %s22
        %s193 = smul.u32 4, %s23
        %p194 = scmp.lt.s32.totalorder %s192, 63
        %s195 = scalar_select %p194, %s192, 63
        %p196 = scmp.lt.s32.totalorder %s193, 3
        %s197 = scalar_select %p196, %s193, 3
        %s198 = smul.addr %s195, 4
        %s199 = sadd.s32 %s197, %s198
        %s200 = smul.addr %s199, 4
        %s201 = scalar_lea.vmem %s0, %s200
        %p202 = pneg %p53
        %p203 = pneg %p50
        %p204 = pneg %p74
        %p205 = pneg %p71
        %p206 = pneg %p95
        %p207 = pneg %p92
        %p208 = pneg %p116
        %p209 = pneg %p113
        %p210 = pneg %p142
        %p211 = pneg %p139
        %s212 = sand.u32 %s129, 1
        %s213 = scalar_lea.sflag [#allocation4], %s212
        %s214 = sand.u32 %s129, 1
        %s215 = smul.addr %s214, 256
        %s216 = scalar_lea.vmem [#allocation3], %s215
        %s217 = smul.u32 32, %s22
        %s218 = smul.u32 4, %s23
        %p219 = scmp.lt.s32.totalorder %s217, 63
        %s220 = scalar_select %p219, %s217, 63
        %p221 = scmp.lt.s32.totalorder %s218, 3
        %s222 = scalar_select %p221, %s218, 3
        %s223 = smul.addr %s220, 4
        %s224 = sadd.s32 %s222, %s223
        %s225 = smul.addr %s224, 4
        %s226 = scalar_lea.vmem %s0, %s225
        %s227 = smul.u32 32, %s22
        %s228 = smul.u32 4, %s23
        %s229 = smul.u32 32, %s22
        %p231 = scmp.eq.s32.totalorder %s23, 0
        // Predicated region
        $region37: #{graph_convolution.1} parent=35 // pred_check
          %p232 = pneg %p231
        $region38: #{graph_convolution.1} parent=35 // pred_check_branch
          %234 = sbr.rel (%p232) target = $region40
        $region39: #{graph_convolution.1} parent=35 // pred_region
          %235 = vst [vmem:[#allocation2] sm:$0xff] 0.0
          %236 = vst [vmem:[#allocation2 + $0x8] sm:$0xff] 0.0
          %237 = vst [vmem:[#allocation2 + $0x10] sm:$0xff] 0.0
          %238 = vst [vmem:[#allocation2 + $0x18] sm:$0xff] 0.0
          %239 = vst [vmem:[#allocation2 + $0x20] sm:$0xff] 0.0
          %240 = vst [vmem:[#allocation2 + $0x28] sm:$0xff] 0.0
          %241 = vst [vmem:[#allocation2 + $0x30] sm:$0xff] 0.0
          %242 = vst [vmem:[#allocation2 + $0x38] sm:$0xff] 0.0
          %243 = vst [vmem:[#allocation2 + $0x40] sm:$0xff] 0.0
          %244 = vst [vmem:[#allocation2 + $0x48] sm:$0xff] 0.0
          %245 = vst [vmem:[#allocation2 + $0x50] sm:$0xff] 0.0
          %246 = vst [vmem:[#allocation2 + $0x58] sm:$0xff] 0.0
          %247 = vst [vmem:[#allocation2 + $0x60] sm:$0xff] 0.0
          %248 = vst [vmem:[#allocation2 + $0x68] sm:$0xff] 0.0
          %249 = vst [vmem:[#allocation2 + $0x70] sm:$0xff] 0.0
          %250 = vst [vmem:[#allocation2 + $0x78] sm:$0xff] 0.0
          %251 = vst [vmem:[#allocation2 + $0x80] sm:$0xff] 0.0
          %252 = vst [vmem:[#allocation2 + $0x88] sm:$0xff] 0.0
          %253 = vst [vmem:[#allocation2 + $0x90] sm:$0xff] 0.0
          %254 = vst [vmem:[#allocation2 + $0x98] sm:$0xff] 0.0
          %255 = vst [vmem:[#allocation2 + $0xa0] sm:$0xff] 0.0
          %256 = vst [vmem:[#allocation2 + $0xa8] sm:$0xff] 0.0
          %257 = vst [vmem:[#allocation2 + $0xb0] sm:$0xff] 0.0
          %258 = vst [vmem:[#allocation2 + $0xb8] sm:$0xff] 0.0
          %259 = vst [vmem:[#allocation2 + $0xc0] sm:$0xff] 0.0
          %260 = vst [vmem:[#allocation2 + $0xc8] sm:$0xff] 0.0
          %261 = vst [vmem:[#allocation2 + $0xd0] sm:$0xff] 0.0
          %262 = vst [vmem:[#allocation2 + $0xd8] sm:$0xff] 0.0
          %263 = vst [vmem:[#allocation2 + $0xe0] sm:$0xff] 0.0
          %264 = vst [vmem:[#allocation2 + $0xe8] sm:$0xff] 0.0
          %265 = vst [vmem:[#allocation2 + $0xf0] sm:$0xff] 0.0
          %266 = vst [vmem:[#allocation2 + $0xf8] sm:$0xff] 0.0
        $region40: #{graph_convolution.1} parent=35 // pred_fallthru
          _
        %s267 = smul.u32 %s23, 512
        %s268 = sshra.s32 %s267, 3
        %s269 = sand.u32 %s267, 7
        %s270 = smul.addr %s268, 4
        %s271 = scalar_lea.vmem %s1, %s270
        %v272 = vld [vmem:[%s271] sm:$0xf]
        %v273 = vld [vmem:[%s271 + $0x4] sm:$0xf]
        %v274 = vld [vmem:[%s271 + $0x8] sm:$0xf]
        %v275 = vld [vmem:[%s271 + $0xc] sm:$0xf]
        %v276 = vld [vmem:[%s271 + $0x10] sm:$0xf]
        %v277 = vld [vmem:[%s271 + $0x14] sm:$0xf]
        %v278 = vld [vmem:[%s271 + $0x18] sm:$0xf]
        %v279 = vld [vmem:[%s271 + $0x1c] sm:$0xf]
        %v280 = vld [vmem:[%s271 + $0x20] sm:$0xf]
        %v281 = vld [vmem:[%s271 + $0x24] sm:$0xf]
        %v282 = vld [vmem:[%s271 + $0x28] sm:$0xf]
        %v283 = vld [vmem:[%s271 + $0x2c] sm:$0xf]
        %v284 = vld [vmem:[%s271 + $0x30] sm:$0xf]
        %v285 = vld [vmem:[%s271 + $0x34] sm:$0xf]
        %v286 = vld [vmem:[%s271 + $0x38] sm:$0xf]
        %v287 = vld [vmem:[%s271 + $0x3c] sm:$0xf]
        %v288 = vld [vmem:[%s271 + $0x40] sm:$0xf]
        %v289 = vld [vmem:[%s271 + $0x44] sm:$0xf]
        %v290 = vld [vmem:[%s271 + $0x48] sm:$0xf]
        %v291 = vld [vmem:[%s271 + $0x4c] sm:$0xf]
        %v292 = vld [vmem:[%s271 + $0x50] sm:$0xf]
        %v293 = vld [vmem:[%s271 + $0x54] sm:$0xf]
        %v294 = vld [vmem:[%s271 + $0x58] sm:$0xf]
        %v295 = vld [vmem:[%s271 + $0x5c] sm:$0xf]
        %v296 = vld [vmem:[%s271 + $0x60] sm:$0xf]
        %v297 = vld [vmem:[%s271 + $0x64] sm:$0xf]
        %v298 = vld [vmem:[%s271 + $0x68] sm:$0xf]
        %v299 = vld [vmem:[%s271 + $0x6c] sm:$0xf]
        %v300 = vld [vmem:[%s271 + $0x70] sm:$0xf]
        %v301 = vld [vmem:[%s271 + $0x74] sm:$0xf]
        %v302 = vld [vmem:[%s271 + $0x78] sm:$0xf]
        %v303 = vld [vmem:[%s271 + $0x7c] sm:$0xf]
        %v304 = vld [vmem:[%s271 + $0x80] sm:$0xf]
        %v305 = vld [vmem:[%s271 + $0x84] sm:$0xf]
        %v306 = vld [vmem:[%s271 + $0x88] sm:$0xf]
        %v307 = vld [vmem:[%s271 + $0x8c] sm:$0xf]
        %v308 = vld [vmem:[%s271 + $0x90] sm:$0xf]
        %v309 = vld [vmem:[%s271 + $0x94] sm:$0xf]
        %v310 = vld [vmem:[%s271 + $0x98] sm:$0xf]
        %v311 = vld [vmem:[%s271 + $0x9c] sm:$0xf]
        %v312 = vld [vmem:[%s271 + $0xa0] sm:$0xf]
        %v313 = vld [vmem:[%s271 + $0xa4] sm:$0xf]
        %v314 = vld [vmem:[%s271 + $0xa8] sm:$0xf]
        %v315 = vld [vmem:[%s271 + $0xac] sm:$0xf]
        %v316 = vld [vmem:[%s271 + $0xb0] sm:$0xf]
        %v317 = vld [vmem:[%s271 + $0xb4] sm:$0xf]
        %v318 = vld [vmem:[%s271 + $0xb8] sm:$0xf]
        %v319 = vld [vmem:[%s271 + $0xbc] sm:$0xf]
        %v320 = vld [vmem:[%s271 + $0xc0] sm:$0xf]
        %v321 = vld [vmem:[%s271 + $0xc4] sm:$0xf]
        %v322 = vld [vmem:[%s271 + $0xc8] sm:$0xf]
        %v323 = vld [vmem:[%s271 + $0xcc] sm:$0xf]
        %v324 = vld [vmem:[%s271 + $0xd0] sm:$0xf]
        %v325 = vld [vmem:[%s271 + $0xd4] sm:$0xf]
        %v326 = vld [vmem:[%s271 + $0xd8] sm:$0xf]
        %v327 = vld [vmem:[%s271 + $0xdc] sm:$0xf]
        %v328 = vld [vmem:[%s271 + $0xe0] sm:$0xf]
        %v329 = vld [vmem:[%s271 + $0xe4] sm:$0xf]
        %v330 = vld [vmem:[%s271 + $0xe8] sm:$0xf]
        %v331 = vld [vmem:[%s271 + $0xec] sm:$0xf]
        %v332 = vld [vmem:[%s271 + $0xf0] sm:$0xf]
        %v333 = vld [vmem:[%s271 + $0xf4] sm:$0xf]
        %v334 = vld [vmem:[%s271 + $0xf8] sm:$0xf]
        %v335 = vld [vmem:[%s271 + $0xfc] sm:$0xf]
        %v336 = vld [vmem:[#allocation2] sm:$0xff]
        %v337 = vld [vmem:[#allocation2 + $0x8] sm:$0xff]
        %v338 = vld [vmem:[#allocation2 + $0x10] sm:$0xff]
        %v339 = vld [vmem:[#allocation2 + $0x18] sm:$0xff]
        %v340 = vld [vmem:[#allocation2 + $0x20] sm:$0xff]
        %v341 = vld [vmem:[#allocation2 + $0x28] sm:$0xff]
        %v342 = vld [vmem:[#allocation2 + $0x30] sm:$0xff]
        %v343 = vld [vmem:[#allocation2 + $0x38] sm:$0xff]
        %v344 = vld [vmem:[#allocation2 + $0x40] sm:$0xff]
        %v345 = vld [vmem:[#allocation2 + $0x48] sm:$0xff]
        %v346 = vld [vmem:[#allocation2 + $0x50] sm:$0xff]
        %v347 = vld [vmem:[#allocation2 + $0x58] sm:$0xff]
        %v348 = vld [vmem:[#allocation2 + $0x60] sm:$0xff]
        %v349 = vld [vmem:[#allocation2 + $0x68] sm:$0xff]
        %v350 = vld [vmem:[#allocation2 + $0x70] sm:$0xff]
        %v351 = vld [vmem:[#allocation2 + $0x78] sm:$0xff]
        %v352 = vld [vmem:[#allocation2 + $0x80] sm:$0xff]
        %v353 = vld [vmem:[#allocation2 + $0x88] sm:$0xff]
        %v354 = vld [vmem:[#allocation2 + $0x90] sm:$0xff]
        %v355 = vld [vmem:[#allocation2 + $0x98] sm:$0xff]
        %v356 = vld [vmem:[#allocation2 + $0xa0] sm:$0xff]
        %v357 = vld [vmem:[#allocation2 + $0xa8] sm:$0xff]
        %v358 = vld [vmem:[#allocation2 + $0xb0] sm:$0xff]
        %v359 = vld [vmem:[#allocation2 + $0xb8] sm:$0xff]
        %v360 = vld [vmem:[#allocation2 + $0xc0] sm:$0xff]
        %v361 = vld [vmem:[#allocation2 + $0xc8] sm:$0xff]
        %v362 = vld [vmem:[#allocation2 + $0xd0] sm:$0xff]
        %v363 = vld [vmem:[#allocation2 + $0xd8] sm:$0xff]
        %v364 = vld [vmem:[#allocation2 + $0xe0] sm:$0xff]
        %v365 = vld [vmem:[#allocation2 + $0xe8] sm:$0xff]
        %v366 = vld [vmem:[#allocation2 + $0xf0] sm:$0xff]
        %v367 = vld [vmem:[#allocation2 + $0xf8] sm:$0xff]
        %v368 = vld [vmem:[%s226] sm:$0xff]
        %v369 = vld [vmem:[%s226 + $0x8] sm:$0xff]
        %v370 = vld [vmem:[%s226 + $0x10] sm:$0xff]
        %v371 = vld [vmem:[%s226 + $0x18] sm:$0xff]
        %v372 = vld [vmem:[%s226 + $0x20] sm:$0xff]
        %v373 = vld [vmem:[%s226 + $0x28] sm:$0xff]
        %v374 = vld [vmem:[%s226 + $0x30] sm:$0xff]
        %v375 = vld [vmem:[%s226 + $0x38] sm:$0xff]
        %v376 = vld [vmem:[%s226 + $0x40] sm:$0xff]
        %v377 = vld [vmem:[%s226 + $0x48] sm:$0xff]
        %v378 = vld [vmem:[%s226 + $0x50] sm:$0xff]
        %v379 = vld [vmem:[%s226 + $0x58] sm:$0xff]
        %v380 = vld [vmem:[%s226 + $0x60] sm:$0xff]
        %v381 = vld [vmem:[%s226 + $0x68] sm:$0xff]
        %v382 = vld [vmem:[%s226 + $0x70] sm:$0xff]
        %v383 = vld [vmem:[%s226 + $0x78] sm:$0xff]
        %v384 = vld [vmem:[%s226 + $0x80] sm:$0xff]
        %v385 = vld [vmem:[%s226 + $0x88] sm:$0xff]
        %v386 = vld [vmem:[%s226 + $0x90] sm:$0xff]
        %v387 = vld [vmem:[%s226 + $0x98] sm:$0xff]
        %v388 = vld [vmem:[%s226 + $0xa0] sm:$0xff]
        %v389 = vld [vmem:[%s226 + $0xa8] sm:$0xff]
        %v390 = vld [vmem:[%s226 + $0xb0] sm:$0xff]
        %v391 = vld [vmem:[%s226 + $0xb8] sm:$0xff]
        %v392 = vld [vmem:[%s226 + $0xc0] sm:$0xff]
        %v393 = vld [vmem:[%s226 + $0xc8] sm:$0xff]
        %v394 = vld [vmem:[%s226 + $0xd0] sm:$0xff]
        %v395 = vld [vmem:[%s226 + $0xd8] sm:$0xff]
        %v396 = vld [vmem:[%s226 + $0xe0] sm:$0xff]
        %v397 = vld [vmem:[%s226 + $0xe8] sm:$0xff]
        %v398 = vld [vmem:[%s226 + $0xf0] sm:$0xff]
        %v399 = vld [vmem:[%s226 + $0xf8] sm:$0xff]
        %v400 = vld [vmem:[%s226 + $0x100] sm:$0xff]
        %v401 = vld [vmem:[%s226 + $0x108] sm:$0xff]
        %v402 = vld [vmem:[%s226 + $0x110] sm:$0xff]
        %v403 = vld [vmem:[%s226 + $0x118] sm:$0xff]
        %v404 = vld [vmem:[%s226 + $0x120] sm:$0xff]
        %v405 = vld [vmem:[%s226 + $0x128] sm:$0xff]
        %v406 = vld [vmem:[%s226 + $0x130] sm:$0xff]
        %v407 = vld [vmem:[%s226 + $0x138] sm:$0xff]
        %v408 = vld [vmem:[%s226 + $0x140] sm:$0xff]
        %v409 = vld [vmem:[%s226 + $0x148] sm:$0xff]
        %v410 = vld [vmem:[%s226 + $0x150] sm:$0xff]
        %v411 = vld [vmem:[%s226 + $0x158] sm:$0xff]
        %v412 = vld [vmem:[%s226 + $0x160] sm:$0xff]
        %v413 = vld [vmem:[%s226 + $0x168] sm:$0xff]
        %v414 = vld [vmem:[%s226 + $0x170] sm:$0xff]
        %v415 = vld [vmem:[%s226 + $0x178] sm:$0xff]
        %v416 = vld [vmem:[%s226 + $0x180] sm:$0xff]
        %v417 = vld [vmem:[%s226 + $0x188] sm:$0xff]
        %v418 = vld [vmem:[%s226 + $0x190] sm:$0xff]
        %v419 = vld [vmem:[%s226 + $0x198] sm:$0xff]
        %v420 = vld [vmem:[%s226 + $0x1a0] sm:$0xff]
        %v421 = vld [vmem:[%s226 + $0x1a8] sm:$0xff]
        %v422 = vld [vmem:[%s226 + $0x1b0] sm:$0xff]
        %v423 = vld [vmem:[%s226 + $0x1b8] sm:$0xff]
        %v424 = vld [vmem:[%s226 + $0x1c0] sm:$0xff]
        %v425 = vld [vmem:[%s226 + $0x1c8] sm:$0xff]
        %v426 = vld [vmem:[%s226 + $0x1d0] sm:$0xff]
        %v427 = vld [vmem:[%s226 + $0x1d8] sm:$0xff]
        %v428 = vld [vmem:[%s226 + $0x1e0] sm:$0xff]
        %v429 = vld [vmem:[%s226 + $0x1e8] sm:$0xff]
        %v430 = vld [vmem:[%s226 + $0x1f0] sm:$0xff]
        %v431 = vld [vmem:[%s226 + $0x1f8] sm:$0xff]
        %v496 = vunpack.c.l.b16 %v368
        %v497 = vunpack.c.h.b16 %v368
        %v498 = vunpack.c.l.b16 %v369
        %v499 = vunpack.c.h.b16 %v369
        %v500 = vunpack.c.l.b16 %v370
        %v501 = vunpack.c.h.b16 %v370
        %v502 = vunpack.c.l.b16 %v371
        %v503 = vunpack.c.h.b16 %v371
        %v504 = vunpack.c.l.b16 %v372
        %v505 = vunpack.c.h.b16 %v372
        %v506 = vunpack.c.l.b16 %v373
        %v507 = vunpack.c.h.b16 %v373
        %v508 = vunpack.c.l.b16 %v374
        %v509 = vunpack.c.h.b16 %v374
        %v510 = vunpack.c.l.b16 %v375
        %v511 = vunpack.c.h.b16 %v375
        %v512 = vunpack.c.l.b16 %v376
        %v513 = vunpack.c.h.b16 %v376
        %v514 = vunpack.c.l.b16 %v377
        %v515 = vunpack.c.h.b16 %v377
        %v516 = vunpack.c.l.b16 %v378
        %v517 = vunpack.c.h.b16 %v378
        %v518 = vunpack.c.l.b16 %v379
        %v519 = vunpack.c.h.b16 %v379
        %v520 = vunpack.c.l.b16 %v380
        %v521 = vunpack.c.h.b16 %v380
        %v522 = vunpack.c.l.b16 %v381
        %v523 = vunpack.c.h.b16 %v381
        %v524 = vunpack.c.l.b16 %v382
        %v525 = vunpack.c.h.b16 %v382
        %v526 = vunpack.c.l.b16 %v383
        %v527 = vunpack.c.h.b16 %v383
        %v528 = vunpack.c.l.b16 %v384
        %v529 = vunpack.c.h.b16 %v384
        %v530 = vunpack.c.l.b16 %v385
        %v531 = vunpack.c.h.b16 %v385
        %v532 = vunpack.c.l.b16 %v386
        %v533 = vunpack.c.h.b16 %v386
        %v534 = vunpack.c.l.b16 %v387
        %v535 = vunpack.c.h.b16 %v387
        %v536 = vunpack.c.l.b16 %v388
        %v537 = vunpack.c.h.b16 %v388
        %v538 = vunpack.c.l.b16 %v389
        %v539 = vunpack.c.h.b16 %v389
        %v540 = vunpack.c.l.b16 %v390
        %v541 = vunpack.c.h.b16 %v390
        %v542 = vunpack.c.l.b16 %v391
        %v543 = vunpack.c.h.b16 %v391
        %v544 = vunpack.c.l.b16 %v392
        %v545 = vunpack.c.h.b16 %v392
        %v546 = vunpack.c.l.b16 %v393
        %v547 = vunpack.c.h.b16 %v393
        %v548 = vunpack.c.l.b16 %v394
        %v549 = vunpack.c.h.b16 %v394
        %v550 = vunpack.c.l.b16 %v395
        %v551 = vunpack.c.h.b16 %v395
        %v552 = vunpack.c.l.b16 %v396
        %v553 = vunpack.c.h.b16 %v396
        %v554 = vunpack.c.l.b16 %v397
        %v555 = vunpack.c.h.b16 %v397
        %v556 = vunpack.c.l.b16 %v398
        %v557 = vunpack.c.h.b16 %v398
        %v558 = vunpack.c.l.b16 %v399
        %v559 = vunpack.c.h.b16 %v399
        %v560 = vunpack.c.l.b16 %v400
        %v561 = vunpack.c.h.b16 %v400
        %v562 = vunpack.c.l.b16 %v401
        %v563 = vunpack.c.h.b16 %v401
        %v564 = vunpack.c.l.b16 %v402
        %v565 = vunpack.c.h.b16 %v402
        %v566 = vunpack.c.l.b16 %v403
        %v567 = vunpack.c.h.b16 %v403
        %v568 = vunpack.c.l.b16 %v404
        %v569 = vunpack.c.h.b16 %v404
        %v570 = vunpack.c.l.b16 %v405
        %v571 = vunpack.c.h.b16 %v405
        %v572 = vunpack.c.l.b16 %v406
        %v573 = vunpack.c.h.b16 %v406
        %v574 = vunpack.c.l.b16 %v407
        %v575 = vunpack.c.h.b16 %v407
        %v576 = vunpack.c.l.b16 %v408
        %v577 = vunpack.c.h.b16 %v408
        %v578 = vunpack.c.l.b16 %v409
        %v579 = vunpack.c.h.b16 %v409
        %v580 = vunpack.c.l.b16 %v410
        %v581 = vunpack.c.h.b16 %v410
        %v582 = vunpack.c.l.b16 %v411
        %v583 = vunpack.c.h.b16 %v411
        %v584 = vunpack.c.l.b16 %v412
        %v585 = vunpack.c.h.b16 %v412
        %v586 = vunpack.c.l.b16 %v413
        %v587 = vunpack.c.h.b16 %v413
        %v588 = vunpack.c.l.b16 %v414
        %v589 = vunpack.c.h.b16 %v414
        %v590 = vunpack.c.l.b16 %v415
        %v591 = vunpack.c.h.b16 %v415
        %v592 = vunpack.c.l.b16 %v416
        %v593 = vunpack.c.h.b16 %v416
        %v594 = vunpack.c.l.b16 %v417
        %v595 = vunpack.c.h.b16 %v417
        %v596 = vunpack.c.l.b16 %v418
        %v597 = vunpack.c.h.b16 %v418
        %v598 = vunpack.c.l.b16 %v419
        %v599 = vunpack.c.h.b16 %v419
        %v600 = vunpack.c.l.b16 %v420
        %v601 = vunpack.c.h.b16 %v420
        %v602 = vunpack.c.l.b16 %v421
        %v603 = vunpack.c.h.b16 %v421
        %v604 = vunpack.c.l.b16 %v422
        %v605 = vunpack.c.h.b16 %v422
        %v606 = vunpack.c.l.b16 %v423
        %v607 = vunpack.c.h.b16 %v423
        %v608 = vunpack.c.l.b16 %v424
        %v609 = vunpack.c.h.b16 %v424
        %v610 = vunpack.c.l.b16 %v425
        %v611 = vunpack.c.h.b16 %v425
        %v612 = vunpack.c.l.b16 %v426
        %v613 = vunpack.c.h.b16 %v426
        %v614 = vunpack.c.l.b16 %v427
        %v615 = vunpack.c.h.b16 %v427
        %v616 = vunpack.c.l.b16 %v428
        %v617 = vunpack.c.h.b16 %v428
        %v618 = vunpack.c.l.b16 %v429
        %v619 = vunpack.c.h.b16 %v429
        %v620 = vunpack.c.l.b16 %v430
        %v621 = vunpack.c.h.b16 %v430
        %v622 = vunpack.c.l.b16 %v431
        %v623 = vunpack.c.h.b16 %v431
        %v624 = vpack.c.b16 %v500, %v496
        %v625 = vpack.c.b16 %v501, %v497
        %v626 = vpack.c.b16 %v502, %v498
        %v627 = vpack.c.b16 %v503, %v499
        %v628 = vpack.c.b16 %v508, %v504
        %v629 = vpack.c.b16 %v509, %v505
        %v630 = vpack.c.b16 %v510, %v506
        %v631 = vpack.c.b16 %v511, %v507
        %v632 = vpack.c.b16 %v516, %v512
        %v633 = vpack.c.b16 %v517, %v513
        %v634 = vpack.c.b16 %v518, %v514
        %v635 = vpack.c.b16 %v519, %v515
        %v636 = vpack.c.b16 %v524, %v520
        %v637 = vpack.c.b16 %v525, %v521
        %v638 = vpack.c.b16 %v526, %v522
        %v639 = vpack.c.b16 %v527, %v523
        %v640 = vpack.c.b16 %v532, %v528
        %v641 = vpack.c.b16 %v533, %v529
        %v642 = vpack.c.b16 %v534, %v530
        %v643 = vpack.c.b16 %v535, %v531
        %v644 = vpack.c.b16 %v540, %v536
        %v645 = vpack.c.b16 %v541, %v537
        %v646 = vpack.c.b16 %v542, %v538
        %v647 = vpack.c.b16 %v543, %v539
        %v648 = vpack.c.b16 %v548, %v544
        %v649 = vpack.c.b16 %v549, %v545
        %v650 = vpack.c.b16 %v550, %v546
        %v651 = vpack.c.b16 %v551, %v547
        %v652 = vpack.c.b16 %v556, %v552
        %v653 = vpack.c.b16 %v557, %v553
        %v654 = vpack.c.b16 %v558, %v554
        %v655 = vpack.c.b16 %v559, %v555
        %v656 = vpack.c.b16 %v564, %v560
        %v657 = vpack.c.b16 %v565, %v561
        %v658 = vpack.c.b16 %v566, %v562
        %v659 = vpack.c.b16 %v567, %v563
        %v660 = vpack.c.b16 %v572, %v568
        %v661 = vpack.c.b16 %v573, %v569
        %v662 = vpack.c.b16 %v574, %v570
        %v663 = vpack.c.b16 %v575, %v571
        %v664 = vpack.c.b16 %v580, %v576
        %v665 = vpack.c.b16 %v581, %v577
        %v666 = vpack.c.b16 %v582, %v578
        %v667 = vpack.c.b16 %v583, %v579
        %v668 = vpack.c.b16 %v588, %v584
        %v669 = vpack.c.b16 %v589, %v585
        %v670 = vpack.c.b16 %v590, %v586
        %v671 = vpack.c.b16 %v591, %v587
        %v672 = vpack.c.b16 %v596, %v592
        %v673 = vpack.c.b16 %v597, %v593
        %v674 = vpack.c.b16 %v598, %v594
        %v675 = vpack.c.b16 %v599, %v595
        %v676 = vpack.c.b16 %v604, %v600
        %v677 = vpack.c.b16 %v605, %v601
        %v678 = vpack.c.b16 %v606, %v602
        %v679 = vpack.c.b16 %v607, %v603
        %v680 = vpack.c.b16 %v612, %v608
        %v681 = vpack.c.b16 %v613, %v609
        %v682 = vpack.c.b16 %v614, %v610
        %v683 = vpack.c.b16 %v615, %v611
        %v684 = vpack.c.b16 %v620, %v616
        %v685 = vpack.c.b16 %v621, %v617
        %v686 = vpack.c.b16 %v622, %v618
        %v687 = vpack.c.b16 %v623, %v619
        %v816 = vunpack.c.l.b16 %v272
        %v817 = vunpack.c.l.b16 %v273
        %v818 = vunpack.c.l.b16 %v274
        %v819 = vunpack.c.l.b16 %v275
        %v820 = vunpack.c.l.b16 %v276
        %v821 = vunpack.c.l.b16 %v277
        %v822 = vunpack.c.l.b16 %v278
        %v823 = vunpack.c.l.b16 %v279
        %v824 = vunpack.c.l.b16 %v280
        %v825 = vunpack.c.l.b16 %v281
        %v826 = vunpack.c.l.b16 %v282
        %v827 = vunpack.c.l.b16 %v283
        %v828 = vunpack.c.l.b16 %v284
        %v829 = vunpack.c.l.b16 %v285
        %v830 = vunpack.c.l.b16 %v286
        %v831 = vunpack.c.l.b16 %v287
        %v832 = vunpack.c.l.b16 %v288
        %v833 = vunpack.c.l.b16 %v289
        %v834 = vunpack.c.l.b16 %v290
        %v835 = vunpack.c.l.b16 %v291
        %v836 = vunpack.c.l.b16 %v292
        %v837 = vunpack.c.l.b16 %v293
        %v838 = vunpack.c.l.b16 %v294
        %v839 = vunpack.c.l.b16 %v295
        %v840 = vunpack.c.l.b16 %v296
        %v841 = vunpack.c.l.b16 %v297
        %v842 = vunpack.c.l.b16 %v298
        %v843 = vunpack.c.l.b16 %v299
        %v844 = vunpack.c.l.b16 %v300
        %v845 = vunpack.c.l.b16 %v301
        %v846 = vunpack.c.l.b16 %v302
        %v847 = vunpack.c.l.b16 %v303
        %v848 = vunpack.c.l.b16 %v304
        %v849 = vunpack.c.l.b16 %v305
        %v850 = vunpack.c.l.b16 %v306
        %v851 = vunpack.c.l.b16 %v307
        %v852 = vunpack.c.l.b16 %v308
        %v853 = vunpack.c.l.b16 %v309
        %v854 = vunpack.c.l.b16 %v310
        %v855 = vunpack.c.l.b16 %v311
        %v856 = vunpack.c.l.b16 %v312
        %v857 = vunpack.c.l.b16 %v313
        %v858 = vunpack.c.l.b16 %v314
        %v859 = vunpack.c.l.b16 %v315
        %v860 = vunpack.c.l.b16 %v316
        %v861 = vunpack.c.l.b16 %v317
        %v862 = vunpack.c.l.b16 %v318
        %v863 = vunpack.c.l.b16 %v319
        %v864 = vunpack.c.l.b16 %v320
        %v865 = vunpack.c.l.b16 %v321
        %v866 = vunpack.c.l.b16 %v322
        %v867 = vunpack.c.l.b16 %v323
        %v868 = vunpack.c.l.b16 %v324
        %v869 = vunpack.c.l.b16 %v325
        %v870 = vunpack.c.l.b16 %v326
        %v871 = vunpack.c.l.b16 %v327
        %v872 = vunpack.c.l.b16 %v328
        %v873 = vunpack.c.l.b16 %v329
        %v874 = vunpack.c.l.b16 %v330
        %v875 = vunpack.c.l.b16 %v331
        %v876 = vunpack.c.l.b16 %v332
        %v877 = vunpack.c.l.b16 %v333
        %v878 = vunpack.c.l.b16 %v334
        %v879 = vunpack.c.l.b16 %v335
        %v880 = vpack.c.b16 %v817, %v816
        %v881 = vpack.c.b16 %v819, %v818
        %v882 = vpack.c.b16 %v821, %v820
        %v883 = vpack.c.b16 %v823, %v822
        %v884 = vpack.c.b16 %v825, %v824
        %v885 = vpack.c.b16 %v827, %v826
        %v886 = vpack.c.b16 %v829, %v828
        %v887 = vpack.c.b16 %v831, %v830
        %v888 = vpack.c.b16 %v833, %v832
        %v889 = vpack.c.b16 %v835, %v834
        %v890 = vpack.c.b16 %v837, %v836
        %v891 = vpack.c.b16 %v839, %v838
        %v892 = vpack.c.b16 %v841, %v840
        %v893 = vpack.c.b16 %v843, %v842
        %v894 = vpack.c.b16 %v845, %v844
        %v895 = vpack.c.b16 %v847, %v846
        %v896 = vpack.c.b16 %v849, %v848
        %v897 = vpack.c.b16 %v851, %v850
        %v898 = vpack.c.b16 %v853, %v852
        %v899 = vpack.c.b16 %v855, %v854
        %v900 = vpack.c.b16 %v857, %v856
        %v901 = vpack.c.b16 %v859, %v858
        %v902 = vpack.c.b16 %v861, %v860
        %v903 = vpack.c.b16 %v863, %v862
        %v904 = vpack.c.b16 %v865, %v864
        %v905 = vpack.c.b16 %v867, %v866
        %v906 = vpack.c.b16 %v869, %v868
        %v907 = vpack.c.b16 %v871, %v870
        %v908 = vpack.c.b16 %v873, %v872
        %v909 = vpack.c.b16 %v875, %v874
        %v910 = vpack.c.b16 %v877, %v876
        %v911 = vpack.c.b16 %v879, %v878
        %944 = vmatprep.subr.bf16.mxu0 0
        %945 = vmatpush1.bf16.msra.mxu0 %v887
        %946 = vmatprep.subr.bf16.mxu0 0
        %947 = vmatpush1.bf16.msra.mxu0 %v886
        %948 = vmatprep.subr.bf16.mxu0 0
        %949 = vmatpush1.bf16.msra.mxu0 %v885
        %950 = vmatprep.subr.bf16.mxu0 0
        %951 = vmatpush1.bf16.msra.mxu0 %v884
        %952 = vmatprep.subr.bf16.mxu0 0
        %953 = vmatpush1.bf16.msra.mxu0 %v883
        %954 = vmatprep.subr.bf16.mxu0 0
        %955 = vmatpush1.bf16.msra.mxu0 %v882
        %956 = vmatprep.subr.bf16.mxu0 0
        %957 = vmatpush1.bf16.msra.mxu0 %v881
        %958 = vmatprep.subr.bf16.mxu0 0
        %959 = vmatpush1.bf16.msra.mxu0 %v880
        %960 = vmatprep.subr.bf16.mxu0 0
        %961 = vmatpush2.bf16.msra.mxu0 %v895
        %962 = vmatprep.subr.bf16.mxu0 0
        %963 = vmatpush2.bf16.msra.mxu0 %v894
        %964 = vmatprep.subr.bf16.mxu0 0
        %965 = vmatpush2.bf16.msra.mxu0 %v893
        %966 = vmatprep.subr.bf16.mxu0 0
        %967 = vmatpush2.bf16.msra.mxu0 %v892
        %968 = vmatprep.subr.bf16.mxu0 0
        %969 = vmatpush2.bf16.msra.mxu0 %v891
        %970 = vmatprep.subr.bf16.mxu0 0
        %971 = vmatpush2.bf16.msra.mxu0 %v890
        %972 = vmatprep.subr.bf16.mxu0 0
        %973 = vmatpush2.bf16.msra.mxu0 %v889
        %974 = vmatprep.subr.bf16.mxu0 0
        %975 = vmatpush2.bf16.msra.mxu0 %v888
        %976 = vmatprep.mubr.bf16.mxu0 %v625
        %977 = vmatmul.mubr.bf16.gmra.mxu0 %v624
        %v978 = vpop.f32.mrf.mxu0
        %v979 = vadd.f32 0.0, %v978
        %v980 = vpop.f32.mrf.mxu0
        %v981 = vpop.f32.mrf.mxu0
        %v982 = vadd.f32 0.0, %v981
        %v983 = vpop.f32.mrf.mxu0
        %984 = vmatprep.mubr.bf16.mxu0 %v629
        %985 = vmatmul.mubr.bf16.gmra.mxu0 %v628
        %v986 = vpop.f32.mrf.mxu0
        %v987 = vadd.f32 0.0, %v986
        %v988 = vpop.f32.mrf.mxu0
        %v989 = vpop.f32.mrf.mxu0
        %v990 = vadd.f32 0.0, %v989
        %v991 = vpop.f32.mrf.mxu0
        %992 = vmatprep.mubr.bf16.mxu0 %v633
        %993 = vmatmul.mubr.bf16.gmra.mxu0 %v632
        %v994 = vpop.f32.mrf.mxu0
        %v995 = vadd.f32 0.0, %v994
        %v996 = vpop.f32.mrf.mxu0
        %v997 = vpop.f32.mrf.mxu0
        %v998 = vadd.f32 0.0, %v997
        %v999 = vpop.f32.mrf.mxu0
        %1000 = vmatprep.mubr.bf16.mxu0 %v637
        %1001 = vmatmul.mubr.bf16.gmra.mxu0 %v636
        %v1002 = vpop.f32.mrf.mxu0
        %v1003 = vadd.f32 0.0, %v1002
        %v1004 = vpop.f32.mrf.mxu0
        %v1005 = vpop.f32.mrf.mxu0
        %v1006 = vadd.f32 0.0, %v1005
        %v1007 = vpop.f32.mrf.mxu0
        %1008 = vmatprep.mubr.bf16.mxu0 %v641
        %1009 = vmatmul.mubr.bf16.gmra.mxu0 %v640
        %v1010 = vpop.f32.mrf.mxu0
        %v1011 = vadd.f32 0.0, %v1010
        %v1012 = vpop.f32.mrf.mxu0
        %v1013 = vpop.f32.mrf.mxu0
        %v1014 = vadd.f32 0.0, %v1013
        %v1015 = vpop.f32.mrf.mxu0
        %1016 = vmatprep.mubr.bf16.mxu0 %v645
        %1017 = vmatmul.mubr.bf16.gmra.mxu0 %v644
        %v1018 = vpop.f32.mrf.mxu0
        %v1019 = vadd.f32 0.0, %v1018
        %v1020 = vpop.f32.mrf.mxu0
        %v1021 = vpop.f32.mrf.mxu0
        %v1022 = vadd.f32 0.0, %v1021
        %v1023 = vpop.f32.mrf.mxu0
        %1024 = vmatprep.mubr.bf16.mxu0 %v649
        %1025 = vmatmul.mubr.bf16.gmra.mxu0 %v648
        %v1026 = vpop.f32.mrf.mxu0
        %v1027 = vadd.f32 0.0, %v1026
        %v1028 = vpop.f32.mrf.mxu0
        %v1029 = vpop.f32.mrf.mxu0
        %v1030 = vadd.f32 0.0, %v1029
        %v1031 = vpop.f32.mrf.mxu0
        %1032 = vmatprep.mubr.bf16.mxu0 %v653
        %1033 = vmatmul.mubr.bf16.gmra.mxu0 %v652
        %v1034 = vpop.f32.mrf.mxu0
        %v1035 = vadd.f32 0.0, %v1034
        %v1036 = vpop.f32.mrf.mxu0
        %v1037 = vpop.f32.mrf.mxu0
        %v1038 = vadd.f32 0.0, %v1037
        %v1039 = vpop.f32.mrf.mxu0
        %1040 = vmatprep.mubr.bf16.mxu0 %v657
        %1041 = vmatmul.mubr.bf16.gmra.mxu0 %v656
        %v1042 = vpop.f32.mrf.mxu0
        %v1043 = vadd.f32 0.0, %v1042
        %v1044 = vpop.f32.mrf.mxu0
        %v1045 = vpop.f32.mrf.mxu0
        %v1046 = vadd.f32 0.0, %v1045
        %v1047 = vpop.f32.mrf.mxu0
        %1048 = vmatprep.mubr.bf16.mxu0 %v661
        %1049 = vmatmul.mubr.bf16.gmra.mxu0 %v660
        %v1050 = vpop.f32.mrf.mxu0
        %v1051 = vadd.f32 0.0, %v1050
        %v1052 = vpop.f32.mrf.mxu0
        %v1053 = vpop.f32.mrf.mxu0
        %v1054 = vadd.f32 0.0, %v1053
        %v1055 = vpop.f32.mrf.mxu0
        %1056 = vmatprep.mubr.bf16.mxu0 %v665
        %1057 = vmatmul.mubr.bf16.gmra.mxu0 %v664
        %v1058 = vpop.f32.mrf.mxu0
        %v1059 = vadd.f32 0.0, %v1058
        %v1060 = vpop.f32.mrf.mxu0
        %v1061 = vpop.f32.mrf.mxu0
        %v1062 = vadd.f32 0.0, %v1061
        %v1063 = vpop.f32.mrf.mxu0
        %1064 = vmatprep.mubr.bf16.mxu0 %v669
        %1065 = vmatmul.mubr.bf16.gmra.mxu0 %v668
        %v1066 = vpop.f32.mrf.mxu0
        %v1067 = vadd.f32 0.0, %v1066
        %v1068 = vpop.f32.mrf.mxu0
        %v1069 = vpop.f32.mrf.mxu0
        %v1070 = vadd.f32 0.0, %v1069
        %v1071 = vpop.f32.mrf.mxu0
        %1072 = vmatprep.mubr.bf16.mxu0 %v673
        %1073 = vmatmul.mubr.bf16.gmra.mxu0 %v672
        %v1074 = vpop.f32.mrf.mxu0
        %v1075 = vadd.f32 0.0, %v1074
        %v1076 = vpop.f32.mrf.mxu0
        %v1077 = vpop.f32.mrf.mxu0
        %v1078 = vadd.f32 0.0, %v1077
        %v1079 = vpop.f32.mrf.mxu0
        %1080 = vmatprep.mubr.bf16.mxu0 %v677
        %1081 = vmatmul.mubr.bf16.gmra.mxu0 %v676
        %v1082 = vpop.f32.mrf.mxu0
        %v1083 = vadd.f32 0.0, %v1082
        %v1084 = vpop.f32.mrf.mxu0
        %v1085 = vpop.f32.mrf.mxu0
        %v1086 = vadd.f32 0.0, %v1085
        %v1087 = vpop.f32.mrf.mxu0
        %1088 = vmatprep.mubr.bf16.mxu0 %v681
        %1089 = vmatmul.mubr.bf16.gmra.mxu0 %v680
        %v1090 = vpop.f32.mrf.mxu0
        %v1091 = vadd.f32 0.0, %v1090
        %v1092 = vpop.f32.mrf.mxu0
        %v1093 = vpop.f32.mrf.mxu0
        %v1094 = vadd.f32 0.0, %v1093
        %v1095 = vpop.f32.mrf.mxu0
        %1096 = vmatprep.mubr.bf16.mxu0 %v685
        %1097 = vmatmul.mubr.bf16.gmra.mxu0 %v684
        %v1098 = vpop.f32.mrf.mxu0
        %v1099 = vadd.f32 0.0, %v1098
        %v1100 = vpop.f32.mrf.mxu0
        %v1101 = vpop.f32.mrf.mxu0
        %v1102 = vadd.f32 0.0, %v1101
        %v1103 = vpop.f32.mrf.mxu0
        %1104 = vdwg.mxu0
        %1105 = vmatprep.subr.bf16.mxu0 0
        %1106 = vmatpush1.bf16.msra.mxu0 %v903
        %1107 = vmatprep.subr.bf16.mxu0 0
        %1108 = vmatpush1.bf16.msra.mxu0 %v902
        %1109 = vmatprep.subr.bf16.mxu0 0
        %1110 = vmatpush1.bf16.msra.mxu0 %v901
        %1111 = vmatprep.subr.bf16.mxu0 0
        %1112 = vmatpush1.bf16.msra.mxu0 %v900
        %1113 = vmatprep.subr.bf16.mxu0 0
        %1114 = vmatpush1.bf16.msra.mxu0 %v899
        %1115 = vmatprep.subr.bf16.mxu0 0
        %1116 = vmatpush1.bf16.msra.mxu0 %v898
        %1117 = vmatprep.subr.bf16.mxu0 0
        %1118 = vmatpush1.bf16.msra.mxu0 %v897
        %1119 = vmatprep.subr.bf16.mxu0 0
        %1120 = vmatpush1.bf16.msra.mxu0 %v896
        %1121 = vmatprep.subr.bf16.mxu0 0
        %1122 = vmatpush2.bf16.msra.mxu0 %v911
        %1123 = vmatprep.subr.bf16.mxu0 0
        %1124 = vmatpush2.bf16.msra.mxu0 %v910
        %1125 = vmatprep.subr.bf16.mxu0 0
        %1126 = vmatpush2.bf16.msra.mxu0 %v909
        %1127 = vmatprep.subr.bf16.mxu0 0
        %1128 = vmatpush2.bf16.msra.mxu0 %v908
        %1129 = vmatprep.subr.bf16.mxu0 0
        %1130 = vmatpush2.bf16.msra.mxu0 %v907
        %1131 = vmatprep.subr.bf16.mxu0 0
        %1132 = vmatpush2.bf16.msra.mxu0 %v906
        %1133 = vmatprep.subr.bf16.mxu0 0
        %1134 = vmatpush2.bf16.msra.mxu0 %v905
        %1135 = vmatprep.subr.bf16.mxu0 0
        %1136 = vmatpush2.bf16.msra.mxu0 %v904
        %1137 = vmatprep.mubr.bf16.mxu0 %v627
        %1138 = vmatmul.mubr.bf16.gmra.mxu0 %v626
        %v1139 = vpop.f32.mrf.mxu0
        %v1140 = vadd.f32 %v979, %v1139
        %v1141 = vpop.f32.mrf.mxu0
        %v1142 = vpop.f32.mrf.mxu0
        %v1143 = vadd.f32 %v982, %v1142
        %v1144 = vpop.f32.mrf.mxu0
        %1145 = vmatprep.mubr.bf16.mxu0 %v631
        %1146 = vmatmul.mubr.bf16.gmra.mxu0 %v630
        %v1147 = vpop.f32.mrf.mxu0
        %v1148 = vadd.f32 %v987, %v1147
        %v1149 = vpop.f32.mrf.mxu0
        %v1150 = vpop.f32.mrf.mxu0
        %v1151 = vadd.f32 %v990, %v1150
        %v1152 = vpop.f32.mrf.mxu0
        %1153 = vmatprep.mubr.bf16.mxu0 %v635
        %1154 = vmatmul.mubr.bf16.gmra.mxu0 %v634
        %v1155 = vpop.f32.mrf.mxu0
        %v1156 = vadd.f32 %v995, %v1155
        %v1157 = vpop.f32.mrf.mxu0
        %v1158 = vpop.f32.mrf.mxu0
        %v1159 = vadd.f32 %v998, %v1158
        %v1160 = vpop.f32.mrf.mxu0
        %1161 = vmatprep.mubr.bf16.mxu0 %v639
        %1162 = vmatmul.mubr.bf16.gmra.mxu0 %v638
        %v1163 = vpop.f32.mrf.mxu0
        %v1164 = vadd.f32 %v1003, %v1163
        %v1165 = vpop.f32.mrf.mxu0
        %v1166 = vpop.f32.mrf.mxu0
        %v1167 = vadd.f32 %v1006, %v1166
        %v1168 = vpop.f32.mrf.mxu0
        %1169 = vmatprep.mubr.bf16.mxu0 %v643
        %1170 = vmatmul.mubr.bf16.gmra.mxu0 %v642
        %v1171 = vpop.f32.mrf.mxu0
        %v1172 = vadd.f32 %v1011, %v1171
        %v1173 = vpop.f32.mrf.mxu0
        %v1174 = vpop.f32.mrf.mxu0
        %v1175 = vadd.f32 %v1014, %v1174
        %v1176 = vpop.f32.mrf.mxu0
        %1177 = vmatprep.mubr.bf16.mxu0 %v647
        %1178 = vmatmul.mubr.bf16.gmra.mxu0 %v646
        %v1179 = vpop.f32.mrf.mxu0
        %v1180 = vadd.f32 %v1019, %v1179
        %v1181 = vpop.f32.mrf.mxu0
        %v1182 = vpop.f32.mrf.mxu0
        %v1183 = vadd.f32 %v1022, %v1182
        %v1184 = vpop.f32.mrf.mxu0
        %1185 = vmatprep.mubr.bf16.mxu0 %v651
        %1186 = vmatmul.mubr.bf16.gmra.mxu0 %v650
        %v1187 = vpop.f32.mrf.mxu0
        %v1188 = vadd.f32 %v1027, %v1187
        %v1189 = vpop.f32.mrf.mxu0
        %v1190 = vpop.f32.mrf.mxu0
        %v1191 = vadd.f32 %v1030, %v1190
        %v1192 = vpop.f32.mrf.mxu0
        %1193 = vmatprep.mubr.bf16.mxu0 %v655
        %1194 = vmatmul.mubr.bf16.gmra.mxu0 %v654
        %v1195 = vpop.f32.mrf.mxu0
        %v1196 = vadd.f32 %v1035, %v1195
        %v1197 = vpop.f32.mrf.mxu0
        %v1198 = vpop.f32.mrf.mxu0
        %v1199 = vadd.f32 %v1038, %v1198
        %v1200 = vpop.f32.mrf.mxu0
        %1201 = vmatprep.mubr.bf16.mxu0 %v659
        %1202 = vmatmul.mubr.bf16.gmra.mxu0 %v658
        %v1203 = vpop.f32.mrf.mxu0
        %v1204 = vadd.f32 %v1043, %v1203
        %v1205 = vpop.f32.mrf.mxu0
        %v1206 = vpop.f32.mrf.mxu0
        %v1207 = vadd.f32 %v1046, %v1206
        %v1208 = vpop.f32.mrf.mxu0
        %1209 = vmatprep.mubr.bf16.mxu0 %v663
        %1210 = vmatmul.mubr.bf16.gmra.mxu0 %v662
        %v1211 = vpop.f32.mrf.mxu0
        %v1212 = vadd.f32 %v1051, %v1211
        %v1213 = vpop.f32.mrf.mxu0
        %v1214 = vpop.f32.mrf.mxu0
        %v1215 = vadd.f32 %v1054, %v1214
        %v1216 = vpop.f32.mrf.mxu0
        %1217 = vmatprep.mubr.bf16.mxu0 %v667
        %1218 = vmatmul.mubr.bf16.gmra.mxu0 %v666
        %v1219 = vpop.f32.mrf.mxu0
        %v1220 = vadd.f32 %v1059, %v1219
        %v1221 = vpop.f32.mrf.mxu0
        %v1222 = vpop.f32.mrf.mxu0
        %v1223 = vadd.f32 %v1062, %v1222
        %v1224 = vpop.f32.mrf.mxu0
        %1225 = vmatprep.mubr.bf16.mxu0 %v671
        %1226 = vmatmul.mubr.bf16.gmra.mxu0 %v670
        %v1227 = vpop.f32.mrf.mxu0
        %v1228 = vadd.f32 %v1067, %v1227
        %v1229 = vpop.f32.mrf.mxu0
        %v1230 = vpop.f32.mrf.mxu0
        %v1231 = vadd.f32 %v1070, %v1230
        %v1232 = vpop.f32.mrf.mxu0
        %1233 = vmatprep.mubr.bf16.mxu0 %v675
        %1234 = vmatmul.mubr.bf16.gmra.mxu0 %v674
        %v1235 = vpop.f32.mrf.mxu0
        %v1236 = vadd.f32 %v1075, %v1235
        %v1237 = vpop.f32.mrf.mxu0
        %v1238 = vpop.f32.mrf.mxu0
        %v1239 = vadd.f32 %v1078, %v1238
        %v1240 = vpop.f32.mrf.mxu0
        %1241 = vmatprep.mubr.bf16.mxu0 %v679
        %1242 = vmatmul.mubr.bf16.gmra.mxu0 %v678
        %v1243 = vpop.f32.mrf.mxu0
        %v1244 = vadd.f32 %v1083, %v1243
        %v1245 = vpop.f32.mrf.mxu0
        %v1246 = vpop.f32.mrf.mxu0
        %v1247 = vadd.f32 %v1086, %v1246
        %v1248 = vpop.f32.mrf.mxu0
        %1249 = vmatprep.mubr.bf16.mxu0 %v683
        %1250 = vmatmul.mubr.bf16.gmra.mxu0 %v682
        %v1251 = vpop.f32.mrf.mxu0
        %v1252 = vadd.f32 %v1091, %v1251
        %v1253 = vpop.f32.mrf.mxu0
        %v1254 = vpop.f32.mrf.mxu0
        %v1255 = vadd.f32 %v1094, %v1254
        %v1256 = vpop.f32.mrf.mxu0
        %1257 = vmatprep.mubr.bf16.mxu0 %v687
        %1258 = vmatmul.mubr.bf16.gmra.mxu0 %v686
        %v1259 = vpop.f32.mrf.mxu0
        %v1260 = vadd.f32 %v1099, %v1259
        %v1261 = vpop.f32.mrf.mxu0
        %v1262 = vpop.f32.mrf.mxu0
        %v1263 = vadd.f32 %v1102, %v1262
        %v1264 = vpop.f32.mrf.mxu0
        %1265 = vdwg.mxu0
        %v1266 = vadd.f32 %v336, %v1140
        %v1267 = vadd.f32 %v337, %v1143
        %v1268 = vadd.f32 %v338, %v1148
        %v1269 = vadd.f32 %v339, %v1151
        %v1270 = vadd.f32 %v340, %v1156
        %v1271 = vadd.f32 %v341, %v1159
        %v1272 = vadd.f32 %v342, %v1164
        %v1273 = vadd.f32 %v343, %v1167
        %v1274 = vadd.f32 %v344, %v1172
        %v1275 = vadd.f32 %v345, %v1175
        %v1276 = vadd.f32 %v346, %v1180
        %v1277 = vadd.f32 %v347, %v1183
        %v1278 = vadd.f32 %v348, %v1188
        %v1279 = vadd.f32 %v349, %v1191
        %v1280 = vadd.f32 %v350, %v1196
        %v1281 = vadd.f32 %v351, %v1199
        %v1282 = vadd.f32 %v352, %v1204
        %v1283 = vadd.f32 %v353, %v1207
        %v1284 = vadd.f32 %v354, %v1212
        %v1285 = vadd.f32 %v355, %v1215
        %v1286 = vadd.f32 %v356, %v1220
        %v1287 = vadd.f32 %v357, %v1223
        %v1288 = vadd.f32 %v358, %v1228
        %v1289 = vadd.f32 %v359, %v1231
        %v1290 = vadd.f32 %v360, %v1236
        %v1291 = vadd.f32 %v361, %v1239
        %v1292 = vadd.f32 %v362, %v1244
        %v1293 = vadd.f32 %v363, %v1247
        %v1294 = vadd.f32 %v364, %v1252
        %v1295 = vadd.f32 %v365, %v1255
        %v1296 = vadd.f32 %v366, %v1260
        %v1297 = vadd.f32 %v367, %v1263
        %1298 = vst [vmem:[#allocation2] sm:$0xff] %v1266
        %1299 = vst [vmem:[#allocation2 + $0x8] sm:$0xff] %v1267
        %1300 = vst [vmem:[#allocation2 + $0x10] sm:$0xff] %v1268
        %1301 = vst [vmem:[#allocation2 + $0x18] sm:$0xff] %v1269
        %1302 = vst [vmem:[#allocation2 + $0x20] sm:$0xff] %v1270
        %1303 = vst [vmem:[#allocation2 + $0x28] sm:$0xff] %v1271
        %1304 = vst [vmem:[#allocation2 + $0x30] sm:$0xff] %v1272
        %1305 = vst [vmem:[#allocation2 + $0x38] sm:$0xff] %v1273
        %1306 = vst [vmem:[#allocation2 + $0x40] sm:$0xff] %v1274
        %1307 = vst [vmem:[#allocation2 + $0x48] sm:$0xff] %v1275
        %1308 = vst [vmem:[#allocation2 + $0x50] sm:$0xff] %v1276
        %1309 = vst [vmem:[#allocation2 + $0x58] sm:$0xff] %v1277
        %1310 = vst [vmem:[#allocation2 + $0x60] sm:$0xff] %v1278
        %1311 = vst [vmem:[#allocation2 + $0x68] sm:$0xff] %v1279
        %1312 = vst [vmem:[#allocation2 + $0x70] sm:$0xff] %v1280
        %1313 = vst [vmem:[#allocation2 + $0x78] sm:$0xff] %v1281
        %1314 = vst [vmem:[#allocation2 + $0x80] sm:$0xff] %v1282
        %1315 = vst [vmem:[#allocation2 + $0x88] sm:$0xff] %v1283
        %1316 = vst [vmem:[#allocation2 + $0x90] sm:$0xff] %v1284
        %1317 = vst [vmem:[#allocation2 + $0x98] sm:$0xff] %v1285
        %1318 = vst [vmem:[#allocation2 + $0xa0] sm:$0xff] %v1286
        %1319 = vst [vmem:[#allocation2 + $0xa8] sm:$0xff] %v1287
        %1320 = vst [vmem:[#allocation2 + $0xb0] sm:$0xff] %v1288
        %1321 = vst [vmem:[#allocation2 + $0xb8] sm:$0xff] %v1289
        %1322 = vst [vmem:[#allocation2 + $0xc0] sm:$0xff] %v1290
        %1323 = vst [vmem:[#allocation2 + $0xc8] sm:$0xff] %v1291
        %1324 = vst [vmem:[#allocation2 + $0xd0] sm:$0xff] %v1292
        %1325 = vst [vmem:[#allocation2 + $0xd8] sm:$0xff] %v1293
        %1326 = vst [vmem:[#allocation2 + $0xe0] sm:$0xff] %v1294
        %1327 = vst [vmem:[#allocation2 + $0xe8] sm:$0xff] %v1295
        %1328 = vst [vmem:[#allocation2 + $0xf0] sm:$0xff] %v1296
        %1329 = vst [vmem:[#allocation2 + $0xf8] sm:$0xff] %v1297
        // Predicated region
        $region41: #{graph_convolution.1} parent=35 // pred_check
          %p1330 = pneg %p231
        $region42: #{graph_convolution.1} parent=35 // pred_check_branch
          %1332 = sbr.rel (%p1330) target = $region44
        $region43: #{graph_convolution.1} parent=35 // pred_region
          %v1333 = vld [vmem:[#allocation2] sm:$0xff]
          %v1334 = vld [vmem:[#allocation2 + $0x8] sm:$0xff]
          %v1335 = vld [vmem:[#allocation2 + $0x10] sm:$0xff]
          %v1336 = vld [vmem:[#allocation2 + $0x18] sm:$0xff]
          %v1337 = vld [vmem:[#allocation2 + $0x20] sm:$0xff]
          %v1338 = vld [vmem:[#allocation2 + $0x28] sm:$0xff]
          %v1339 = vld [vmem:[#allocation2 + $0x30] sm:$0xff]
          %v1340 = vld [vmem:[#allocation2 + $0x38] sm:$0xff]
          %v1341 = vld [vmem:[#allocation2 + $0x40] sm:$0xff]
          %v1342 = vld [vmem:[#allocation2 + $0x48] sm:$0xff]
          %v1343 = vld [vmem:[#allocation2 + $0x50] sm:$0xff]
          %v1344 = vld [vmem:[#allocation2 + $0x58] sm:$0xff]
          %v1345 = vld [vmem:[#allocation2 + $0x60] sm:$0xff]
          %v1346 = vld [vmem:[#allocation2 + $0x68] sm:$0xff]
          %v1347 = vld [vmem:[#allocation2 + $0x70] sm:$0xff]
          %v1348 = vld [vmem:[#allocation2 + $0x78] sm:$0xff]
          %v1349 = vld [vmem:[#allocation2 + $0x80] sm:$0xff]
          %v1350 = vld [vmem:[#allocation2 + $0x88] sm:$0xff]
          %v1351 = vld [vmem:[#allocation2 + $0x90] sm:$0xff]
          %v1352 = vld [vmem:[#allocation2 + $0x98] sm:$0xff]
          %v1353 = vld [vmem:[#allocation2 + $0xa0] sm:$0xff]
          %v1354 = vld [vmem:[#allocation2 + $0xa8] sm:$0xff]
          %v1355 = vld [vmem:[#allocation2 + $0xb0] sm:$0xff]
          %v1356 = vld [vmem:[#allocation2 + $0xb8] sm:$0xff]
          %v1357 = vld [vmem:[#allocation2 + $0xc0] sm:$0xff]
          %v1358 = vld [vmem:[#allocation2 + $0xc8] sm:$0xff]
          %v1359 = vld [vmem:[#allocation2 + $0xd0] sm:$0xff]
          %v1360 = vld [vmem:[#allocation2 + $0xd8] sm:$0xff]
          %v1361 = vld [vmem:[#allocation2 + $0xe0] sm:$0xff]
          %v1362 = vld [vmem:[#allocation2 + $0xe8] sm:$0xff]
          %v1363 = vld [vmem:[#allocation2 + $0xf0] sm:$0xff]
          %v1364 = vld [vmem:[#allocation2 + $0xf8] sm:$0xff]
          %v1365 = vld [vmem:[%s2] sm:$0xff]
          %v1366 = vld [vmem:[%s2 + $0x8] sm:$0xff]
          %v1367 = vld [vmem:[%s2 + $0x10] sm:$0xff]
          %v1368 = vld [vmem:[%s2 + $0x18] sm:$0xff]
          %v1369 = vld [vmem:[%s2 + $0x20] sm:$0xff]
          %v1370 = vld [vmem:[%s2 + $0x28] sm:$0xff]
          %v1371 = vld [vmem:[%s2 + $0x30] sm:$0xff]
          %v1372 = vld [vmem:[%s2 + $0x38] sm:$0xff]
          %v1373 = vld [vmem:[%s2 + $0x40] sm:$0xff]
          %v1374 = vld [vmem:[%s2 + $0x48] sm:$0xff]
          %v1375 = vld [vmem:[%s2 + $0x50] sm:$0xff]
          %v1376 = vld [vmem:[%s2 + $0x58] sm:$0xff]
          %v1377 = vld [vmem:[%s2 + $0x60] sm:$0xff]
          %v1378 = vld [vmem:[%s2 + $0x68] sm:$0xff]
          %v1379 = vld [vmem:[%s2 + $0x70] sm:$0xff]
          %v1380 = vld [vmem:[%s2 + $0x78] sm:$0xff]
          %v1381 = vld [vmem:[%s3] sm:$0x1]
          %v1383 = vlaneseq
          %v1384 = vshrl.u32 %v1383, 7
          %v1385 = vsub.s32 0, %v1384
          %v1386 = vrot.slane %v1381, %v1385
          %1388 = vmatprep.subr.mxu0 0.0
          %1389 = vmatpush1.msra.mxu0 %v1380
          %1390 = vmatprep.subr.mxu0 0.0
          %1391 = vmatpush1.msra.mxu0 %v1379
          %1392 = vmatprep.subr.mxu0 0.0
          %1393 = vmatpush1.msra.mxu0 %v1378
          %1394 = vmatprep.subr.mxu0 0.0
          %1395 = vmatpush1.msra.mxu0 %v1377
          %1396 = vmatprep.subr.mxu0 0.0
          %1397 = vmatpush1.msra.mxu0 %v1376
          %1398 = vmatprep.subr.mxu0 0.0
          %1399 = vmatpush1.msra.mxu0 %v1375
          %1400 = vmatprep.subr.mxu0 0.0
          %1401 = vmatpush1.msra.mxu0 %v1374
          %1402 = vmatprep.subr.mxu0 0.0
          %1403 = vmatpush1.msra.mxu0 %v1373
          %1404 = vmatprep.subr.mxu0 0.0
          %1405 = vmatpush1.msra.mxu0 %v1372
          %1406 = vmatprep.subr.mxu0 0.0
          %1407 = vmatpush1.msra.mxu0 %v1371
          %1408 = vmatprep.subr.mxu0 0.0
          %1409 = vmatpush1.msra.mxu0 %v1370
          %1410 = vmatprep.subr.mxu0 0.0
          %1411 = vmatpush1.msra.mxu0 %v1369
          %1412 = vmatprep.subr.mxu0 0.0
          %1413 = vmatpush1.msra.mxu0 %v1368
          %1414 = vmatprep.subr.mxu0 0.0
          %1415 = vmatpush1.msra.mxu0 %v1367
          %1416 = vmatprep.subr.mxu0 0.0
          %1417 = vmatpush1.msra.mxu0 %v1366
          %1418 = vmatprep.subr.mxu0 0.0
          %1419 = vmatpush1.msra.mxu0 %v1365
          %1420 = vmatprep.subr.mxu0 0.0
          %1421 = vmatpush2.msra.mxu0 0.0
          %1422 = vmatprep.subr.mxu0 0.0
          %1423 = vmatpush2.msra.mxu0 0.0
          %1424 = vmatprep.subr.mxu0 0.0
          %1425 = vmatpush2.msra.mxu0 0.0
          %1426 = vmatprep.subr.mxu0 0.0
          %1427 = vmatpush2.msra.mxu0 0.0
          %1428 = vmatprep.subr.mxu0 0.0
          %1429 = vmatpush2.msra.mxu0 0.0
          %1430 = vmatprep.subr.mxu0 0.0
          %1431 = vmatpush2.msra.mxu0 0.0
          %1432 = vmatprep.subr.mxu0 0.0
          %1433 = vmatpush2.msra.mxu0 0.0
          %1434 = vmatprep.subr.mxu0 0.0
          %1435 = vmatpush2.msra.mxu0 0.0
          %1436 = vmatprep.subr.mxu0 0.0
          %1437 = vmatpush2.msra.mxu0 0.0
          %1438 = vmatprep.subr.mxu0 0.0
          %1439 = vmatpush2.msra.mxu0 0.0
          %1440 = vmatprep.subr.mxu0 0.0
          %1441 = vmatpush2.msra.mxu0 0.0
          %1442 = vmatprep.subr.mxu0 0.0
          %1443 = vmatpush2.msra.mxu0 0.0
          %1444 = vmatprep.subr.mxu0 0.0
          %1445 = vmatpush2.msra.mxu0 0.0
          %1446 = vmatprep.subr.mxu0 0.0
          %1447 = vmatpush2.msra.mxu0 0.0
          %1448 = vmatprep.subr.mxu0 0.0
          %1449 = vmatpush2.msra.mxu0 0.0
          %1450 = vmatprep.subr.mxu0 0.0
          %1451 = vmatpush2.msra.mxu0 0.0
          %1452 = vmatprep.mubr.f32.mxu0 0.0
          %1453 = vmatmul.mubr.f32.gmra.mxu0 %v1333
          %v1454 = vpop.f32.mrf.mxu0
          %v1455 = vadd.f32 %v1386, %v1454
          %v1456 = vpop.f32.mrf.mxu0
          %1457 = vmatprep.mubr.f32.mxu0 0.0
          %1458 = vmatmul.mubr.f32.gmra.mxu0 %v1334
          %v1459 = vpop.f32.mrf.mxu0
          %v1460 = vadd.f32 %v1386, %v1459
          %v1461 = vpop.f32.mrf.mxu0
          %1462 = vmatprep.mubr.f32.mxu0 0.0
          %1463 = vmatmul.mubr.f32.gmra.mxu0 %v1335
          %v1464 = vpop.f32.mrf.mxu0
          %v1465 = vadd.f32 %v1386, %v1464
          %v1466 = vpop.f32.mrf.mxu0
          %1467 = vmatprep.mubr.f32.mxu0 0.0
          %1468 = vmatmul.mubr.f32.gmra.mxu0 %v1336
          %v1469 = vpop.f32.mrf.mxu0
          %v1470 = vadd.f32 %v1386, %v1469
          %v1471 = vpop.f32.mrf.mxu0
          %1472 = vmatprep.mubr.f32.mxu0 0.0
          %1473 = vmatmul.mubr.f32.gmra.mxu0 %v1337
          %v1474 = vpop.f32.mrf.mxu0
          %v1475 = vadd.f32 %v1386, %v1474
          %v1476 = vpop.f32.mrf.mxu0
          %1477 = vmatprep.mubr.f32.mxu0 0.0
          %1478 = vmatmul.mubr.f32.gmra.mxu0 %v1338
          %v1479 = vpop.f32.mrf.mxu0
          %v1480 = vadd.f32 %v1386, %v1479
          %v1481 = vpop.f32.mrf.mxu0
          %1482 = vmatprep.mubr.f32.mxu0 0.0
          %1483 = vmatmul.mubr.f32.gmra.mxu0 %v1339
          %v1484 = vpop.f32.mrf.mxu0
          %v1485 = vadd.f32 %v1386, %v1484
          %v1486 = vpop.f32.mrf.mxu0
          %1487 = vmatprep.mubr.f32.mxu0 0.0
          %1488 = vmatmul.mubr.f32.gmra.mxu0 %v1340
          %v1489 = vpop.f32.mrf.mxu0
          %v1490 = vadd.f32 %v1386, %v1489
          %v1491 = vpop.f32.mrf.mxu0
          %1492 = vmatprep.mubr.f32.mxu0 0.0
          %1493 = vmatmul.mubr.f32.gmra.mxu0 %v1341
          %v1494 = vpop.f32.mrf.mxu0
          %v1495 = vadd.f32 %v1386, %v1494
          %v1496 = vpop.f32.mrf.mxu0
          %1497 = vmatprep.mubr.f32.mxu0 0.0
          %1498 = vmatmul.mubr.f32.gmra.mxu0 %v1342
          %v1499 = vpop.f32.mrf.mxu0
          %v1500 = vadd.f32 %v1386, %v1499
          %v1501 = vpop.f32.mrf.mxu0
          %1502 = vmatprep.mubr.f32.mxu0 0.0
          %1503 = vmatmul.mubr.f32.gmra.mxu0 %v1343
          %v1504 = vpop.f32.mrf.mxu0
          %v1505 = vadd.f32 %v1386, %v1504
          %v1506 = vpop.f32.mrf.mxu0
          %1507 = vmatprep.mubr.f32.mxu0 0.0
          %1508 = vmatmul.mubr.f32.gmra.mxu0 %v1344
          %v1509 = vpop.f32.mrf.mxu0
          %v1510 = vadd.f32 %v1386, %v1509
          %v1511 = vpop.f32.mrf.mxu0
          %1512 = vmatprep.mubr.f32.mxu0 0.0
          %1513 = vmatmul.mubr.f32.gmra.mxu0 %v1345
          %v1514 = vpop.f32.mrf.mxu0
          %v1515 = vadd.f32 %v1386, %v1514
          %v1516 = vpop.f32.mrf.mxu0
          %1517 = vmatprep.mubr.f32.mxu0 0.0
          %1518 = vmatmul.mubr.f32.gmra.mxu0 %v1346
          %v1519 = vpop.f32.mrf.mxu0
          %v1520 = vadd.f32 %v1386, %v1519
          %v1521 = vpop.f32.mrf.mxu0
          %1522 = vmatprep.mubr.f32.mxu0 0.0
          %1523 = vmatmul.mubr.f32.gmra.mxu0 %v1347
          %v1524 = vpop.f32.mrf.mxu0
          %v1525 = vadd.f32 %v1386, %v1524
          %v1526 = vpop.f32.mrf.mxu0
          %1527 = vmatprep.mubr.f32.mxu0 0.0
          %1528 = vmatmul.mubr.f32.gmra.mxu0 %v1348
          %v1529 = vpop.f32.mrf.mxu0
          %v1530 = vadd.f32 %v1386, %v1529
          %v1531 = vpop.f32.mrf.mxu0
          %1532 = vmatprep.mubr.f32.mxu0 0.0
          %1533 = vmatmul.mubr.f32.gmra.mxu0 %v1349
          %v1534 = vpop.f32.mrf.mxu0
          %v1535 = vadd.f32 %v1386, %v1534
          %v1536 = vpop.f32.mrf.mxu0
          %1537 = vmatprep.mubr.f32.mxu0 0.0
          %1538 = vmatmul.mubr.f32.gmra.mxu0 %v1350
          %v1539 = vpop.f32.mrf.mxu0
          %v1540 = vadd.f32 %v1386, %v1539
          %v1541 = vpop.f32.mrf.mxu0
          %1542 = vmatprep.mubr.f32.mxu0 0.0
          %1543 = vmatmul.mubr.f32.gmra.mxu0 %v1351
          %v1544 = vpop.f32.mrf.mxu0
          %v1545 = vadd.f32 %v1386, %v1544
          %v1546 = vpop.f32.mrf.mxu0
          %1547 = vmatprep.mubr.f32.mxu0 0.0
          %1548 = vmatmul.mubr.f32.gmra.mxu0 %v1352
          %v1549 = vpop.f32.mrf.mxu0
          %v1550 = vadd.f32 %v1386, %v1549
          %v1551 = vpop.f32.mrf.mxu0
          %1552 = vmatprep.mubr.f32.mxu0 0.0
          %1553 = vmatmul.mubr.f32.gmra.mxu0 %v1353
          %v1554 = vpop.f32.mrf.mxu0
          %v1555 = vadd.f32 %v1386, %v1554
          %v1556 = vpop.f32.mrf.mxu0
          %1557 = vmatprep.mubr.f32.mxu0 0.0
          %1558 = vmatmul.mubr.f32.gmra.mxu0 %v1354
          %v1559 = vpop.f32.mrf.mxu0
          %v1560 = vadd.f32 %v1386, %v1559
          %v1561 = vpop.f32.mrf.mxu0
          %1562 = vmatprep.mubr.f32.mxu0 0.0
          %1563 = vmatmul.mubr.f32.gmra.mxu0 %v1355
          %v1564 = vpop.f32.mrf.mxu0
          %v1565 = vadd.f32 %v1386, %v1564
          %v1566 = vpop.f32.mrf.mxu0
          %1567 = vmatprep.mubr.f32.mxu0 0.0
          %1568 = vmatmul.mubr.f32.gmra.mxu0 %v1356
          %v1569 = vpop.f32.mrf.mxu0
          %v1570 = vadd.f32 %v1386, %v1569
          %v1571 = vpop.f32.mrf.mxu0
          %1572 = vmatprep.mubr.f32.mxu0 0.0
          %1573 = vmatmul.mubr.f32.gmra.mxu0 %v1357
          %v1574 = vpop.f32.mrf.mxu0
          %v1575 = vadd.f32 %v1386, %v1574
          %v1576 = vpop.f32.mrf.mxu0
          %1577 = vmatprep.mubr.f32.mxu0 0.0
          %1578 = vmatmul.mubr.f32.gmra.mxu0 %v1358
          %v1579 = vpop.f32.mrf.mxu0
          %v1580 = vadd.f32 %v1386, %v1579
          %v1581 = vpop.f32.mrf.mxu0
          %1582 = vmatprep.mubr.f32.mxu0 0.0
          %1583 = vmatmul.mubr.f32.gmra.mxu0 %v1359
          %v1584 = vpop.f32.mrf.mxu0
          %v1585 = vadd.f32 %v1386, %v1584
          %v1586 = vpop.f32.mrf.mxu0
          %1587 = vmatprep.mubr.f32.mxu0 0.0
          %1588 = vmatmul.mubr.f32.gmra.mxu0 %v1360
          %v1589 = vpop.f32.mrf.mxu0
          %v1590 = vadd.f32 %v1386, %v1589
          %v1591 = vpop.f32.mrf.mxu0
          %1592 = vmatprep.mubr.f32.mxu0 0.0
          %1593 = vmatmul.mubr.f32.gmra.mxu0 %v1361
          %v1594 = vpop.f32.mrf.mxu0
          %v1595 = vadd.f32 %v1386, %v1594
          %v1596 = vpop.f32.mrf.mxu0
          %1597 = vmatprep.mubr.f32.mxu0 0.0
          %1598 = vmatmul.mubr.f32.gmra.mxu0 %v1362
          %v1599 = vpop.f32.mrf.mxu0
          %v1600 = vadd.f32 %v1386, %v1599
          %v1601 = vpop.f32.mrf.mxu0
          %1602 = vmatprep.mubr.f32.mxu0 0.0
          %1603 = vmatmul.mubr.f32.gmra.mxu0 %v1363
          %v1604 = vpop.f32.mrf.mxu0
          %v1605 = vadd.f32 %v1386, %v1604
          %v1606 = vpop.f32.mrf.mxu0
          %1607 = vmatprep.mubr.f32.mxu0 0.0
          %1608 = vmatmul.mubr.f32.gmra.mxu0 %v1364
          %v1609 = vpop.f32.mrf.mxu0
          %v1610 = vadd.f32 %v1386, %v1609
          %v1611 = vpop.f32.mrf.mxu0
          %1612 = vdwg.mxu0
          %1613 = vst [vmem:[%s216] sm:$0xff] %v1455
          %1614 = vst [vmem:[%s216 + $0x8] sm:$0xff] %v1460
          %1615 = vst [vmem:[%s216 + $0x10] sm:$0xff] %v1465
          %1616 = vst [vmem:[%s216 + $0x18] sm:$0xff] %v1470
          %1617 = vst [vmem:[%s216 + $0x20] sm:$0xff] %v1475
          %1618 = vst [vmem:[%s216 + $0x28] sm:$0xff] %v1480
          %1619 = vst [vmem:[%s216 + $0x30] sm:$0xff] %v1485
          %1620 = vst [vmem:[%s216 + $0x38] sm:$0xff] %v1490
          %1621 = vst [vmem:[%s216 + $0x40] sm:$0xff] %v1495
          %1622 = vst [vmem:[%s216 + $0x48] sm:$0xff] %v1500
          %1623 = vst [vmem:[%s216 + $0x50] sm:$0xff] %v1505
          %1624 = vst [vmem:[%s216 + $0x58] sm:$0xff] %v1510
          %1625 = vst [vmem:[%s216 + $0x60] sm:$0xff] %v1515
          %1626 = vst [vmem:[%s216 + $0x68] sm:$0xff] %v1520
          %1627 = vst [vmem:[%s216 + $0x70] sm:$0xff] %v1525
          %1628 = vst [vmem:[%s216 + $0x78] sm:$0xff] %v1530
          %1629 = vst [vmem:[%s216 + $0x80] sm:$0xff] %v1535
          %1630 = vst [vmem:[%s216 + $0x88] sm:$0xff] %v1540
          %1631 = vst [vmem:[%s216 + $0x90] sm:$0xff] %v1545
          %1632 = vst [vmem:[%s216 + $0x98] sm:$0xff] %v1550
          %1633 = vst [vmem:[%s216 + $0xa0] sm:$0xff] %v1555
          %1634 = vst [vmem:[%s216 + $0xa8] sm:$0xff] %v1560
          %1635 = vst [vmem:[%s216 + $0xb0] sm:$0xff] %v1565
          %1636 = vst [vmem:[%s216 + $0xb8] sm:$0xff] %v1570
          %1637 = vst [vmem:[%s216 + $0xc0] sm:$0xff] %v1575
          %1638 = vst [vmem:[%s216 + $0xc8] sm:$0xff] %v1580
          %1639 = vst [vmem:[%s216 + $0xd0] sm:$0xff] %v1585
          %1640 = vst [vmem:[%s216 + $0xd8] sm:$0xff] %v1590
          %1641 = vst [vmem:[%s216 + $0xe0] sm:$0xff] %v1595
          %1642 = vst [vmem:[%s216 + $0xe8] sm:$0xff] %v1600
          %1643 = vst [vmem:[%s216 + $0xf0] sm:$0xff] %v1605
          %1644 = vst [vmem:[%s216 + $0xf8] sm:$0xff] %v1610
        $region44: #{graph_convolution.1} parent=35 // pred_fallthru
          _
        %s1645 = sand.u32 %s129, 1
        %s1646 = scalar_lea.sflag [#allocation4], %s1645
        %s1647 = sand.u32 %s129, 1
        %s1648 = smul.addr %s1647, 256
        %s1649 = scalar_lea.vmem [#allocation3], %s1648
        // Predicated region
        $region45: #{graph_convolution.1} parent=35 // pred_check
          %p1650 = pneg %p139
        $region46: #{graph_convolution.1} parent=35 // pred_check_branch
          %1652 = sbr.rel (%p1650) target = $region48
        $region47: #{graph_convolution.1} parent=35 // pred_region
          %s1653 = smul.u32 32, %s22
          %s1655 = ssub.s32 4096, 4096
          %1656 = vsyncadd %s1646, %s1655
          %s1657 = smul.addr %s1653, 128
          %s1658 = scalar_lea.hbm %s4, %s1657
          %s1659 = sshll.u32 %s1649, 4
          %s1660 = int_to_ptr.vmem [resolvable:$true] %s1659
          %1665 = dma.vmem_to_hbm [thread:$0]  %s1660, 4096, %s1658, %s1646, 128, 128, 8
        $region48: #{graph_convolution.1} parent=35 // pred_fallthru
          _
      $region36: #{graph_convolution.1} parent=5 // pred_fallthru
        _
      %p1666 = scmp.le.s32.totalorder 2, %s13
      // Predicated region
      $region49: #{graph_convolution.1} parent=5 // pred_check
        %p1667 = pneg %p1666
      $region50: #{graph_convolution.1} parent=5 // pred_check_branch
        %1669 = sbr.rel (%p1667) target = $region52
      $region51: #{graph_convolution.1} parent=5 // pred_region
        %s1670 = ssub.s32 %s13, 2
        // Predicated region
        $region53: #{graph_convolution.1} parent=51 // pred_check
          %p1671 = pneg %p145
        $region54: #{graph_convolution.1} parent=51 // pred_check_branch
          %1673 = sbr.rel (%p1671) target = $region56
        $region55: #{graph_convolution.1} parent=51 // pred_region
          %s1674 = sand.u32 %s130, 1
          %s1675 = scalar_lea.sflag [#allocation4], %s1674
          %s1676 = sand.u32 %s130, 1
          %s1677 = smul.addr %s1676, 256
          %s1678 = scalar_lea.vmem [#allocation3], %s1677
          %1679 = dma.done %s1675, 4096
        $region56: #{graph_convolution.1} parent=51 // pred_fallthru
          _
      $region52: #{graph_convolution.1} parent=5 // pred_fallthru
        _
    $region6: #{graph_convolution.1} parent=1 // loop_footer
      %s17 = sadd.s32 1, %s13
    $region7: #{graph_convolution.1} parent=1 // loop_footer_branch
      %12 = sbr.rel target = $region3
    $region8: #{graph_convolution.1} parent=1 // loop_exit
      _
    %1680 = vsyncpa [#allocation4], 1
    %s1681 = scalar_lea.sflag [#allocation4], 1
    %1682 = vsyncpa %s1681, 1

</llo_original>
